<compile_context>
chip_gen: v6e
topology: v6e:2x2x1
jax: 0.10.0
libtpu: 0.0.40
codegen_flags: <defaults>
</compile_context>

<pallas_src>
import functools

import jax
import jax.numpy as jnp
from jax.experimental import pallas as pl
from jax.experimental.pallas import tpu as pltpu


def _small_local_attention_kernel(
    x_ref,      # (1, C, HW)      input, channel-major, HW on lanes (also the residual)
    wqkv_ref,   # (KK, 3*hid, C)  fused q|k|v conv weights, one (3*hid, C) slab per tap
    bqkv_ref,   # (3*hid, 1)      fused q|k|v bias (q rows pre-scaled by 1/sqrt(hid))
    wp_ref,     # (C, hid)        1x1 proj_out weight
    bp_ref,     # (C, 1)          proj_out bias
    out_ref,    # (1, C, HW)
    *,
    hidden, height, width, ksize, use_bf16_matmul,
):
    C, HW = x_ref.shape[1], x_ref.shape[2]
    H, W = height, width
    pad = ksize // 2
    x = x_ref[0]                                     # (C, HW) -- read once per batch

    # Lane-index helpers for the im2col boundary masks (built once, reused by all taps).
    lane = jax.lax.broadcasted_iota(jnp.int32, (C, HW), 1)
    if W & (W - 1) == 0:
        col = lane & (W - 1)
    else:
        col = lane % W  # TODO(synk): non-power-of-two W takes the generic int-mod path

    # --- fused q/k/v 3x3 "same" conv: im2col built in VMEM from x via lane rolls ---
    acc = None
    for kh in range(ksize):
        for kw in range(ksize):
            di, dj = kh - pad, kw - pad
            off = di * W + dj
            tap = x if off == 0 else pltpu.roll(x, (-off) % HW, axis=1)
            conds = []
            if di < 0:
                conds.append(lane >= (-di) * W)       # top rows are zero padding
            if di > 0:
                conds.append(lane < (H - di) * W)     # bottom rows are zero padding
            if dj < 0:
                conds.append(col >= -dj)              # left edge
            if dj > 0:
                conds.append(col < W - dj)            # right edge
            if conds:
                mask = conds[0]
                for cond in conds[1:]:
                    mask = jnp.logical_and(mask, cond)
                tap = jnp.where(mask, tap, 0.0)
            part = jnp.dot(wqkv_ref[kh * ksize + kw], tap,
                           preferred_element_type=jnp.float32)   # (3*hid, HW)
            acc = part if acc is None else acc + part
    qkv = acc + bqkv_ref[...]                         # single fused bias add

    h = hidden
    q = qkv[0:h]                                      # (h, HW); scale already folded in
    k = qkv[h:2 * h]                                  # (h, HW)
    v = qkv[2 * h:3 * h]                              # (h, HW)

    # Optional bf16 MXU path for the two big matmuls (f32 accumulation).  Off by
    # default so the 1e-4 tolerance check passes.
    cdt = jnp.bfloat16 if use_bf16_matmul else jnp.float32

    # Scores kept transposed: s_t[j, i] = <q[:, i], k[:, j]>.  Only a tiny
    # (h, HW) -> (HW, h) transpose is needed; both big matmuls stay canonical.
    s_t = jnp.dot(k.T.astype(cdt), q.astype(cdt),
                  preferred_element_type=jnp.float32)             # (HW_key, HW_query)

    # Softmax over keys (sublane axis); normalisation folded into the output so
    # the (HW, HW) map is never divided or rescaled element-wise.
    m = jnp.max(s_t, axis=0, keepdims=True)                       # (1, HW_query)
    e = jnp.exp(s_t - m)                                          # (HW_key, HW_query)
    denom = jnp.sum(e, axis=0, keepdims=True)                     # (1, HW_query)

    o = jnp.dot(v.astype(cdt), e.astype(cdt),
                preferred_element_type=jnp.float32)               # (h, HW_query)
    o = o * pl.reciprocal(denom, approx=False)                    # exact reciprocal

    # 1x1 proj_out + residual, written lane-dense as (C, HW).
    y = jnp.dot(wp_ref[...], o, preferred_element_type=jnp.float32) + bp_ref[...]
    out_ref[0] = x + y


def small_local_attention(x, params, kernel_size=3, use_bf16_matmul=False):
    """x: (B, C, H, W) float32 (PyTorch NCHW convention). Returns (B, C, H, W)."""
    B, C, H, W = x.shape
    hidden = C // 2
    kk = kernel_size
    HW = H * W

    # Channel-major / token-last layout: free reshapes on both ends (no transposes).
    x_flat = x.reshape(B, C, HW)

    # Fold the 1/sqrt(hidden) attention scale into the q conv weights/bias and fuse
    # q|k|v into one weight/bias.  Weights are regrouped per 3x3 tap so the kernel
    # can do the im2col in VMEM: wqkv[kh*kk + kw] is the (3*hidden, C) slab.
    scale = 1.0 / float(hidden) ** 0.5
    w_all = jnp.concatenate(
        [params["wq"] * scale, params["wk"], params["wv"]], axis=0)   # (3h, C, kk, kk)
    wqkv = jnp.transpose(w_all, (2, 3, 0, 1)).reshape(kk * kk, 3 * hidden, C)
    bqkv = jnp.concatenate(
        [params["bq"] * scale, params["bk"], params["bv"]]).reshape(3 * hidden, 1)
    wp = params["wp"].reshape(C, hidden)
    bp = params["bp"].reshape(C, 1)

    kern = functools.partial(
        _small_local_attention_kernel,
        hidden=hidden, height=H, width=W, ksize=kk,
        use_bf16_matmul=use_bf16_matmul)

    out = pl.pallas_call(
        kern,
        out_shape=jax.ShapeDtypeStruct((B, C, HW), jnp.float32),
        grid=(B,),
        in_specs=[
            pl.BlockSpec((1, C, HW), lambda b: (b, 0, 0)),
            pl.BlockSpec((kk * kk, 3 * hidden, C), lambda b: (0, 0, 0)),
            pl.BlockSpec((3 * hidden, 1), lambda b: (0, 0)),
            pl.BlockSpec((C, hidden), lambda b: (0, 0)),
            pl.BlockSpec((C, 1), lambda b: (0, 0)),
        ],
        out_specs=pl.BlockSpec((1, C, HW), lambda b: (b, 0, 0)),
        compiler_params=pltpu.CompilerParams(
            # Batch axis is parallel: on v7x the two TensorCores each take a batch.
            dimension_semantics=("parallel",),
            # Explicit scoped-VMEM budget (also covers v5e's smaller 16 MiB default).
            vmem_limit_bytes=32 * 1024 * 1024,
        ),
    )(x_flat, wqkv, bqkv, wp, bp)

    return out.reshape(B, C, H, W)


def reference_forward(x, params):
    """Pure-JAX reference mirroring the PyTorch forward (NCHW)."""
    def conv(xx, w, b, p):
        y = jax.lax.conv_general_dilated(
            xx, w, window_strides=(1, 1), padding=[(p, p), (p, p)],
            dimension_numbers=("NCHW", "OIHW", "NCHW"))
        return y + b.reshape(1, -1, 1, 1)

    B, C, H, W = x.shape
    q = conv(x, params["wq"], params["bq"], 1).reshape(B, -1, H * W)
    k = conv(x, params["wk"], params["bk"], 1).reshape(B, -1, H * W)
    v = conv(x, params["wv"], params["bv"], 1).reshape(B, -1, H * W)
    s = jnp.einsum("bdq,bdk->bqk", q, k) / (q.shape[1] ** 0.5)
    a = jax.nn.softmax(s, axis=-1)
    o = jnp.einsum("bqk,bdk->bqd", a, v)
    o = o.transpose(0, 2, 1).reshape(B, -1, H, W)
    return x + conv(o, params["wp"], params["bp"], 0)


if __name__ == "__main__":
    B, C, H, W = 2, 4, 16, 16
    hidden = C // 2
    kk = 3

    key = jax.random.PRNGKey(0)
    keys = jax.random.split(key, 9)
    params = {
        "wq": 0.1 * jax.random.normal(keys[0], (hidden, C, kk, kk), jnp.float32),
        "bq": 0.1 * jax.random.normal(keys[1], (hidden,), jnp.float32),
        "wk": 0.1 * jax.random.normal(keys[2], (hidden, C, kk, kk), jnp.float32),
        "bk": 0.1 * jax.random.normal(keys[3], (hidden,), jnp.float32),
        "wv": 0.1 * jax.random.normal(keys[4], (hidden, C, kk, kk), jnp.float32),
        "bv": 0.1 * jax.random.normal(keys[5], (hidden,), jnp.float32),
        "wp": 0.1 * jax.random.normal(keys[6], (C, hidden, 1, 1), jnp.float32),
        "bp": 0.1 * jax.random.normal(keys[7], (C,), jnp.float32),
    }
    x = jax.random.normal(keys[8], (B, C, H, W), jnp.float32)

    out = small_local_attention(x, params)
    out = jax.block_until_ready(out)

    ref = jax.block_until_ready(reference_forward(x, params))
    assert out.shape == (B, C, H, W)
    assert jnp.allclose(out, ref, atol=1e-4, rtol=1e-4), "mismatch vs reference"

    print("KERNEL_OK")
</pallas_src>

<mosaic_0001>
module attributes {stable_mosaic.version = 11 : i64} {
  func.func @_small_local_attention_kernel(%arg0: i32, %arg1: memref<1x4x256xf32, #tpu.memory_space<vmem>>, %arg2: memref<9x6x4xf32, #tpu.memory_space<vmem>>, %arg3: memref<6x1xf32, #tpu.memory_space<vmem>>, %arg4: memref<4x2xf32, #tpu.memory_space<vmem>>, %arg5: memref<4x1xf32, #tpu.memory_space<vmem>>, %arg6: memref<1x4x256xf32, #tpu.memory_space<vmem>>) attributes {dimension_semantics = [#tpu.dimension_semantics<parallel>], iteration_bounds = array<i64: 2>, scalar_prefetch = 0 : i64, scratch_operands = 0 : i64, tpu.core_type = #tpu.core_type<tc>, window_params = [{transform_indices = @transform_0, window_bounds = array<i64: 1, 4, 256>}, {pipeline_mode = #tpu.pipeline_mode<synchronous>, transform_indices = @transform_1, window_bounds = array<i64: 9, 6, 4>}, {pipeline_mode = #tpu.pipeline_mode<synchronous>, transform_indices = @transform_2, window_bounds = array<i64: 6, 1>}, {pipeline_mode = #tpu.pipeline_mode<synchronous>, transform_indices = @transform_3, window_bounds = array<i64: 4, 2>}, {pipeline_mode = #tpu.pipeline_mode<synchronous>, transform_indices = @transform_4, window_bounds = array<i64: 4, 1>}, {transform_indices = @transform_5, window_bounds = array<i64: 1, 4, 256>}]} {
    %c0 = arith.constant 0 : index
    %c0_0 = arith.constant 0 : index
    %c0_1 = arith.constant 0 : index
    %0 = vector.load %arg1[%c0, %c0_0, %c0_1] : memref<1x4x256xf32, #tpu.memory_space<vmem>>, vector<1x4x256xf32>
    %1 = vector.shape_cast %0 : vector<1x4x256xf32> to vector<4x256xf32>
    %2 = tpu.iota {dimensions = array<i32: 1>} : vector<4x256xi32>
    %c15_i32 = arith.constant 15 : i32
    %3 = vector.broadcast %c15_i32 : i32 to vector<4x256xi32>
    %4 = arith.andi %2, %3 : vector<4x256xi32>
    %c17_i32 = arith.constant 17 : i32
    %5 = tpu.dynamic_rotate %1 by %c17_i32 dim 1 : vector<4x256xf32>, i32 -> vector<4x256xf32>
    %c16_i32 = arith.constant 16 : i32
    %6 = vector.broadcast %c16_i32 : i32 to vector<4x256xi32>
    %7 = arith.cmpi sge, %2, %6 : vector<4x256xi32>
    %c1_i32 = arith.constant 1 : i32
    %8 = vector.broadcast %c1_i32 : i32 to vector<4x256xi32>
    %9 = arith.cmpi sge, %4, %8 : vector<4x256xi32>
    %10 = arith.andi %7, %9 : vector<4x256xi1>
    %cst = arith.constant 0.000000e+00 : f32
    %11 = vector.broadcast %cst : f32 to vector<4x256xf32>
    %12 = arith.select %10, %5, %11 : vector<4x256xi1>, vector<4x256xf32>
    %c0_2 = arith.constant 0 : index
    %c0_3 = arith.constant 0 : index
    %c0_4 = arith.constant 0 : index
    %13 = vector.load %arg2[%c0_2, %c0_3, %c0_4] : memref<9x6x4xf32, #tpu.memory_space<vmem>>, vector<1x6x4xf32>
    %14 = vector.shape_cast %13 : vector<1x6x4xf32> to vector<6x4xf32>
    %cst_5 = arith.constant dense<0.000000e+00> : vector<6x256xf32>
    %15 = tpu.matmul %14, %12, %cst_5 {dimension_numbers = #tpu.dot_dimension_numbers<[1], [0], [0], [1], [0, 0, 1, 1], [], []>} : vector<6x4xf32>, vector<4x256xf32>, vector<6x256xf32> -> vector<6x256xf32>
    %c16_i32_6 = arith.constant 16 : i32
    %16 = tpu.dynamic_rotate %1 by %c16_i32_6 dim 1 : vector<4x256xf32>, i32 -> vector<4x256xf32>
    %c16_i32_7 = arith.constant 16 : i32
    %17 = vector.broadcast %c16_i32_7 : i32 to vector<4x256xi32>
    %18 = arith.cmpi sge, %2, %17 : vector<4x256xi32>
    %cst_8 = arith.constant 0.000000e+00 : f32
    %19 = vector.broadcast %cst_8 : f32 to vector<4x256xf32>
    %20 = arith.select %18, %16, %19 : vector<4x256xi1>, vector<4x256xf32>
    %c1 = arith.constant 1 : index
    %c0_9 = arith.constant 0 : index
    %c0_10 = arith.constant 0 : index
    %21 = vector.load %arg2[%c1, %c0_9, %c0_10] : memref<9x6x4xf32, #tpu.memory_space<vmem>>, vector<1x6x4xf32>
    %22 = vector.shape_cast %21 : vector<1x6x4xf32> to vector<6x4xf32>
    %cst_11 = arith.constant dense<0.000000e+00> : vector<6x256xf32>
    %23 = tpu.matmul %22, %20, %cst_11 {dimension_numbers = #tpu.dot_dimension_numbers<[1], [0], [0], [1], [0, 0, 1, 1], [], []>} : vector<6x4xf32>, vector<4x256xf32>, vector<6x256xf32> -> vector<6x256xf32>
    %24 = arith.addf %15, %23 : vector<6x256xf32>
    %c15_i32_12 = arith.constant 15 : i32
    %25 = tpu.dynamic_rotate %1 by %c15_i32_12 dim 1 : vector<4x256xf32>, i32 -> vector<4x256xf32>
    %c16_i32_13 = arith.constant 16 : i32
    %26 = vector.broadcast %c16_i32_13 : i32 to vector<4x256xi32>
    %27 = arith.cmpi sge, %2, %26 : vector<4x256xi32>
    %c15_i32_14 = arith.constant 15 : i32
    %28 = vector.broadcast %c15_i32_14 : i32 to vector<4x256xi32>
    %29 = arith.cmpi slt, %4, %28 : vector<4x256xi32>
    %30 = arith.andi %27, %29 : vector<4x256xi1>
    %cst_15 = arith.constant 0.000000e+00 : f32
    %31 = vector.broadcast %cst_15 : f32 to vector<4x256xf32>
    %32 = arith.select %30, %25, %31 : vector<4x256xi1>, vector<4x256xf32>
    %c2 = arith.constant 2 : index
    %c0_16 = arith.constant 0 : index
    %c0_17 = arith.constant 0 : index
    %33 = vector.load %arg2[%c2, %c0_16, %c0_17] : memref<9x6x4xf32, #tpu.memory_space<vmem>>, vector<1x6x4xf32>
    %34 = vector.shape_cast %33 : vector<1x6x4xf32> to vector<6x4xf32>
    %cst_18 = arith.constant dense<0.000000e+00> : vector<6x256xf32>
    %35 = tpu.matmul %34, %32, %cst_18 {dimension_numbers = #tpu.dot_dimension_numbers<[1], [0], [0], [1], [0, 0, 1, 1], [], []>} : vector<6x4xf32>, vector<4x256xf32>, vector<6x256xf32> -> vector<6x256xf32>
    %36 = arith.addf %24, %35 : vector<6x256xf32>
    %c1_i32_19 = arith.constant 1 : i32
    %37 = tpu.dynamic_rotate %1 by %c1_i32_19 dim 1 : vector<4x256xf32>, i32 -> vector<4x256xf32>
    %c1_i32_20 = arith.constant 1 : i32
    %38 = vector.broadcast %c1_i32_20 : i32 to vector<4x256xi32>
    %39 = arith.cmpi sge, %4, %38 : vector<4x256xi32>
    %cst_21 = arith.constant 0.000000e+00 : f32
    %40 = vector.broadcast %cst_21 : f32 to vector<4x256xf32>
    %41 = arith.select %39, %37, %40 : vector<4x256xi1>, vector<4x256xf32>
    %c3 = arith.constant 3 : index
    %c0_22 = arith.constant 0 : index
    %c0_23 = arith.constant 0 : index
    %42 = vector.load %arg2[%c3, %c0_22, %c0_23] : memref<9x6x4xf32, #tpu.memory_space<vmem>>, vector<1x6x4xf32>
    %43 = vector.shape_cast %42 : vector<1x6x4xf32> to vector<6x4xf32>
    %cst_24 = arith.constant dense<0.000000e+00> : vector<6x256xf32>
    %44 = tpu.matmul %43, %41, %cst_24 {dimension_numbers = #tpu.dot_dimension_numbers<[1], [0], [0], [1], [0, 0, 1, 1], [], []>} : vector<6x4xf32>, vector<4x256xf32>, vector<6x256xf32> -> vector<6x256xf32>
    %45 = arith.addf %36, %44 : vector<6x256xf32>
    %c4 = arith.constant 4 : index
    %c0_25 = arith.constant 0 : index
    %c0_26 = arith.constant 0 : index
    %46 = vector.load %arg2[%c4, %c0_25, %c0_26] : memref<9x6x4xf32, #tpu.memory_space<vmem>>, vector<1x6x4xf32>
    %47 = vector.shape_cast %46 : vector<1x6x4xf32> to vector<6x4xf32>
    %cst_27 = arith.constant dense<0.000000e+00> : vector<6x256xf32>
    %48 = tpu.matmul %47, %1, %cst_27 {dimension_numbers = #tpu.dot_dimension_numbers<[1], [0], [0], [1], [0, 0, 1, 1], [], []>} : vector<6x4xf32>, vector<4x256xf32>, vector<6x256xf32> -> vector<6x256xf32>
    %49 = arith.addf %45, %48 : vector<6x256xf32>
    %c255_i32 = arith.constant 255 : i32
    %50 = tpu.dynamic_rotate %1 by %c255_i32 dim 1 : vector<4x256xf32>, i32 -> vector<4x256xf32>
    %c15_i32_28 = arith.constant 15 : i32
    %51 = vector.broadcast %c15_i32_28 : i32 to vector<4x256xi32>
    %52 = arith.cmpi slt, %4, %51 : vector<4x256xi32>
    %cst_29 = arith.constant 0.000000e+00 : f32
    %53 = vector.broadcast %cst_29 : f32 to vector<4x256xf32>
    %54 = arith.select %52, %50, %53 : vector<4x256xi1>, vector<4x256xf32>
    %c5 = arith.constant 5 : index
    %c0_30 = arith.constant 0 : index
    %c0_31 = arith.constant 0 : index
    %55 = vector.load %arg2[%c5, %c0_30, %c0_31] : memref<9x6x4xf32, #tpu.memory_space<vmem>>, vector<1x6x4xf32>
    %56 = vector.shape_cast %55 : vector<1x6x4xf32> to vector<6x4xf32>
    %cst_32 = arith.constant dense<0.000000e+00> : vector<6x256xf32>
    %57 = tpu.matmul %56, %54, %cst_32 {dimension_numbers = #tpu.dot_dimension_numbers<[1], [0], [0], [1], [0, 0, 1, 1], [], []>} : vector<6x4xf32>, vector<4x256xf32>, vector<6x256xf32> -> vector<6x256xf32>
    %58 = arith.addf %49, %57 : vector<6x256xf32>
    %c241_i32 = arith.constant 241 : i32
    %59 = tpu.dynamic_rotate %1 by %c241_i32 dim 1 : vector<4x256xf32>, i32 -> vector<4x256xf32>
    %c240_i32 = arith.constant 240 : i32
    %60 = vector.broadcast %c240_i32 : i32 to vector<4x256xi32>
    %61 = arith.cmpi slt, %2, %60 : vector<4x256xi32>
    %c1_i32_33 = arith.constant 1 : i32
    %62 = vector.broadcast %c1_i32_33 : i32 to vector<4x256xi32>
    %63 = arith.cmpi sge, %4, %62 : vector<4x256xi32>
    %64 = arith.andi %61, %63 : vector<4x256xi1>
    %cst_34 = arith.constant 0.000000e+00 : f32
    %65 = vector.broadcast %cst_34 : f32 to vector<4x256xf32>
    %66 = arith.select %64, %59, %65 : vector<4x256xi1>, vector<4x256xf32>
    %c6 = arith.constant 6 : index
    %c0_35 = arith.constant 0 : index
    %c0_36 = arith.constant 0 : index
    %67 = vector.load %arg2[%c6, %c0_35, %c0_36] : memref<9x6x4xf32, #tpu.memory_space<vmem>>, vector<1x6x4xf32>
    %68 = vector.shape_cast %67 : vector<1x6x4xf32> to vector<6x4xf32>
    %cst_37 = arith.constant dense<0.000000e+00> : vector<6x256xf32>
    %69 = tpu.matmul %68, %66, %cst_37 {dimension_numbers = #tpu.dot_dimension_numbers<[1], [0], [0], [1], [0, 0, 1, 1], [], []>} : vector<6x4xf32>, vector<4x256xf32>, vector<6x256xf32> -> vector<6x256xf32>
    %70 = arith.addf %58, %69 : vector<6x256xf32>
    %c240_i32_38 = arith.constant 240 : i32
    %71 = tpu.dynamic_rotate %1 by %c240_i32_38 dim 1 : vector<4x256xf32>, i32 -> vector<4x256xf32>
    %c240_i32_39 = arith.constant 240 : i32
    %72 = vector.broadcast %c240_i32_39 : i32 to vector<4x256xi32>
    %73 = arith.cmpi slt, %2, %72 : vector<4x256xi32>
    %cst_40 = arith.constant 0.000000e+00 : f32
    %74 = vector.broadcast %cst_40 : f32 to vector<4x256xf32>
    %75 = arith.select %73, %71, %74 : vector<4x256xi1>, vector<4x256xf32>
    %c7 = arith.constant 7 : index
    %c0_41 = arith.constant 0 : index
    %c0_42 = arith.constant 0 : index
    %76 = vector.load %arg2[%c7, %c0_41, %c0_42] : memref<9x6x4xf32, #tpu.memory_space<vmem>>, vector<1x6x4xf32>
    %77 = vector.shape_cast %76 : vector<1x6x4xf32> to vector<6x4xf32>
    %cst_43 = arith.constant dense<0.000000e+00> : vector<6x256xf32>
    %78 = tpu.matmul %77, %75, %cst_43 {dimension_numbers = #tpu.dot_dimension_numbers<[1], [0], [0], [1], [0, 0, 1, 1], [], []>} : vector<6x4xf32>, vector<4x256xf32>, vector<6x256xf32> -> vector<6x256xf32>
    %79 = arith.addf %70, %78 : vector<6x256xf32>
    %c239_i32 = arith.constant 239 : i32
    %80 = tpu.dynamic_rotate %1 by %c239_i32 dim 1 : vector<4x256xf32>, i32 -> vector<4x256xf32>
    %c240_i32_44 = arith.constant 240 : i32
    %81 = vector.broadcast %c240_i32_44 : i32 to vector<4x256xi32>
    %82 = arith.cmpi slt, %2, %81 : vector<4x256xi32>
    %c15_i32_45 = arith.constant 15 : i32
    %83 = vector.broadcast %c15_i32_45 : i32 to vector<4x256xi32>
    %84 = arith.cmpi slt, %4, %83 : vector<4x256xi32>
    %85 = arith.andi %82, %84 : vector<4x256xi1>
    %cst_46 = arith.constant 0.000000e+00 : f32
    %86 = vector.broadcast %cst_46 : f32 to vector<4x256xf32>
    %87 = arith.select %85, %80, %86 : vector<4x256xi1>, vector<4x256xf32>
    %c8 = arith.constant 8 : index
    %c0_47 = arith.constant 0 : index
    %c0_48 = arith.constant 0 : index
    %88 = vector.load %arg2[%c8, %c0_47, %c0_48] : memref<9x6x4xf32, #tpu.memory_space<vmem>>, vector<1x6x4xf32>
    %89 = vector.shape_cast %88 : vector<1x6x4xf32> to vector<6x4xf32>
    %cst_49 = arith.constant dense<0.000000e+00> : vector<6x256xf32>
    %90 = tpu.matmul %89, %87, %cst_49 {dimension_numbers = #tpu.dot_dimension_numbers<[1], [0], [0], [1], [0, 0, 1, 1], [], []>} : vector<6x4xf32>, vector<4x256xf32>, vector<6x256xf32> -> vector<6x256xf32>
    %91 = arith.addf %79, %90 : vector<6x256xf32>
    %c0_50 = arith.constant 0 : index
    %c0_51 = arith.constant 0 : index
    %92 = vector.load %arg3[%c0_50, %c0_51] : memref<6x1xf32, #tpu.memory_space<vmem>>, vector<6x1xf32>
    %93 = vector.broadcast %92 : vector<6x1xf32> to vector<6x256xf32>
    %94 = arith.addf %91, %93 : vector<6x256xf32>
    %95 = vector.extract_strided_slice %94 {offsets = [0, 0], sizes = [2, 256], strides = [1, 1]} : vector<6x256xf32> to vector<2x256xf32>
    %96 = vector.extract_strided_slice %94 {offsets = [2, 0], sizes = [2, 256], strides = [1, 1]} : vector<6x256xf32> to vector<2x256xf32>
    %97 = vector.extract_strided_slice %94 {offsets = [4, 0], sizes = [2, 256], strides = [1, 1]} : vector<6x256xf32> to vector<2x256xf32>
    %98 = tpu.transpose %96, [1, 0] : vector<2x256xf32> -> vector<256x2xf32>
    %cst_52 = arith.constant dense<0.000000e+00> : vector<256x256xf32>
    %99 = tpu.matmul %98, %95, %cst_52 {dimension_numbers = #tpu.dot_dimension_numbers<[1], [0], [0], [1], [0, 0, 1, 1], [], []>} : vector<256x2xf32>, vector<2x256xf32>, vector<256x256xf32> -> vector<256x256xf32>
    %cst_53 = arith.constant dense<0xFF800000> : vector<256xf32>
    %100 = vector.multi_reduction <maximumf>, %99, %cst_53 [0] : vector<256x256xf32> to vector<256xf32>
    %101 = vector.shape_cast %100 : vector<256xf32> to vector<1x256xf32>
    %102 = vector.broadcast %101 : vector<1x256xf32> to vector<256x256xf32>
    %103 = arith.subf %99, %102 : vector<256x256xf32>
    %104 = math.exp %103 : vector<256x256xf32>
    %cst_54 = arith.constant dense<0.000000e+00> : vector<256xf32>
    %105 = vector.multi_reduction <add>, %104, %cst_54 [0] : vector<256x256xf32> to vector<256xf32>
    %106 = vector.shape_cast %105 : vector<256xf32> to vector<1x256xf32>
    %cst_55 = arith.constant dense<0.000000e+00> : vector<2x256xf32>
    %107 = tpu.matmul %97, %104, %cst_55 {dimension_numbers = #tpu.dot_dimension_numbers<[1], [0], [0], [1], [0, 0, 1, 1], [], []>} : vector<2x256xf32>, vector<256x256xf32>, vector<2x256xf32> -> vector<2x256xf32>
    %108 = tpu.reciprocal %106 : vector<1x256xf32> -> vector<1x256xf32>
    %109 = vector.broadcast %108 : vector<1x256xf32> to vector<2x256xf32>
    %110 = arith.mulf %107, %109 : vector<2x256xf32>
    %c0_56 = arith.constant 0 : index
    %c0_57 = arith.constant 0 : index
    %111 = vector.load %arg4[%c0_56, %c0_57] : memref<4x2xf32, #tpu.memory_space<vmem>>, vector<4x2xf32>
    %cst_58 = arith.constant dense<0.000000e+00> : vector<4x256xf32>
    %112 = tpu.matmul %111, %110, %cst_58 {dimension_numbers = #tpu.dot_dimension_numbers<[1], [0], [0], [1], [0, 0, 1, 1], [], []>} : vector<4x2xf32>, vector<2x256xf32>, vector<4x256xf32> -> vector<4x256xf32>
    %c0_59 = arith.constant 0 : index
    %c0_60 = arith.constant 0 : index
    %113 = vector.load %arg5[%c0_59, %c0_60] : memref<4x1xf32, #tpu.memory_space<vmem>>, vector<4x1xf32>
    %114 = vector.broadcast %113 : vector<4x1xf32> to vector<4x256xf32>
    %115 = arith.addf %112, %114 : vector<4x256xf32>
    %116 = arith.addf %1, %115 : vector<4x256xf32>
    %c0_61 = arith.constant 0 : index
    %c0_62 = arith.constant 0 : index
    %c0_63 = arith.constant 0 : index
    %117 = vector.load %arg6[%c0_61, %c0_62, %c0_63] : memref<1x4x256xf32, #tpu.memory_space<vmem>>, vector<1x4x256xf32>
    %118 = vector.shape_cast %117 : vector<1x4x256xf32> to vector<4x256xf32>
    %119 = vector.shape_cast %116 : vector<4x256xf32> to vector<1x4x256xf32>
    tpu.vector_store %arg6[%c0_61, %c0_62, %c0_63], %119 {strides = array<i32>} : memref<1x4x256xf32, #tpu.memory_space<vmem>>, vector<1x4x256xf32>,
    return
  }
  func.func @transform_0(%arg0: i32) -> (i32, i32, i32) {
    %c0_i32 = arith.constant 0 : i32
    %c0_i32_0 = arith.constant 0 : i32
    %c0_i32_1 = arith.constant 0 : i32
    return %arg0, %c0_i32, %c0_i32_0 : i32, i32, i32
  }
  func.func @transform_1(%arg0: i32) -> (i32, i32, i32) {
    %c0_i32 = arith.constant 0 : i32
    %c0_i32_0 = arith.constant 0 : i32
    %c0_i32_1 = arith.constant 0 : i32
    %c0_i32_2 = arith.constant 0 : i32
    return %c0_i32, %c0_i32_0, %c0_i32_1 : i32, i32, i32
  }
  func.func @transform_2(%arg0: i32) -> (i32, i32) {
    %c0_i32 = arith.constant 0 : i32
    %c0_i32_0 = arith.constant 0 : i32
    %c0_i32_1 = arith.constant 0 : i32
    return %c0_i32, %c0_i32_0 : i32, i32
  }
  func.func @transform_3(%arg0: i32) -> (i32, i32) {
    %c0_i32 = arith.constant 0 : i32
    %c0_i32_0 = arith.constant 0 : i32
    %c0_i32_1 = arith.constant 0 : i32
    return %c0_i32, %c0_i32_0 : i32, i32
  }
  func.func @transform_4(%arg0: i32) -> (i32, i32) {
    %c0_i32 = arith.constant 0 : i32
    %c0_i32_0 = arith.constant 0 : i32
    %c0_i32_1 = arith.constant 0 : i32
    return %c0_i32, %c0_i32_0 : i32, i32
  }
  func.func @transform_5(%arg0: i32) -> (i32, i32, i32) {
    %c0_i32 = arith.constant 0 : i32
    %c0_i32_0 = arith.constant 0 : i32
    %c0_i32_1 = arith.constant 0 : i32
    return %arg0, %c0_i32, %c0_i32_0 : i32, i32, i32
  }
}

</mosaic_0001>

<llo_original>
// kernel: tpu_custom_call.1
$region0: #{tpu_custom_call.1}
  #allocation0 [shape = 'u32[]', space=smem, size = 0x4, offset = 0x4, fixed_abs, tag = 'smem constant byte address 0x4 - core index']
  #allocation1 [shape = 'u32[144,128]{1,0:T(1,128)}', space=vmem, size = 0x12000, scoped, tag = 'internal scratch']
  %s0 = inlined_call_operand.vmem [shape: f32[2,4,256], index: 0, kind: input, shape index: {}]
  %s1 = inlined_call_operand.vmem [shape: f32[9,6,4], index: 1, kind: input, shape index: {}]
  %s2 = inlined_call_operand.vmem [shape: f32[6,1], index: 2, kind: input, shape index: {}]
  %s3 = inlined_call_operand.vmem [shape: f32[4,2], index: 3, kind: input, shape index: {}]
  %s4 = inlined_call_operand.vmem [shape: f32[4,1], index: 4, kind: input, shape index: {}]
  %s5 = inlined_call_operand.hbm [shape: f32[2,4,256], index: 5, kind: output, shape index: {}]
  %s6 = sld [smem:[#allocation0]]
  $region53: #{tpu_custom_call.1} parent=0
    _
  %s8 = ssub.s32 1, %s6
  %s9 = scalar_select 0, %s8, %s6
  $region1: #{tpu_custom_call.1} parent=0
    #allocation2 [shape = 'u8[8192]{0}', space=vmem, size = 0x2000, scoped, tag = 'output window, operand 0']
    #allocation3 [shape = 's32[2]{0}', space=sflag, size = 0x8, scoped, tag = 'scoped memory for tpu_custom_call.1']
    %10 = vsyncpa [#allocation3], 0
    %s11 = scalar_lea.sflag [#allocation3], 1
    %12 = vsyncpa %s11, 0
    loop: start=0, step=1, limit=4
    $region2: #{tpu_custom_call.1} parent=1 // loop_pre_header
      _
    $region3: #{tpu_custom_call.1} parent=1 // loop_header
      %s14 = sphi 0, %s18
      %p15 = scmp.ge.s32.totalorder %s14, 4
      %s24 = sphi 0, %s26
      %s27 = sphi 0, %s24
      %s28 = sphi 0, %s27
      %s44 = sphi 0, %s28
      %s48 = sphi 0, %s48
      %s50 = sphi 0, %s48
      %s51 = sphi 0, %s50
      %s65 = sphi 0, %s51
      %s69 = sphi 0, %s69
      %s71 = sphi 0, %s69
      %s72 = sphi 0, %s71
      %s86 = sphi 0, %s72
      %s90 = sphi 0, %s90
      %s92 = sphi 0, %s90
      %s93 = sphi 0, %s92
      %s107 = sphi 0, %s93
      %s111 = sphi 0, %s111
      %s113 = sphi 0, %s111
      %s114 = sphi 0, %s113
      %s128 = sphi 0, %s114
      %s134 = sphi 0, %s136
      %s137 = sphi 0, %s134
      %s138 = sphi 0, %s137
      %s154 = sphi 0, %s138
    $region4: #{tpu_custom_call.1} parent=1 // loop_header_branch
      %17 = sbr.rel (%p15) target = $region8
    $region5: #{tpu_custom_call.1} parent=1 // loop_body
      %s19 = ssub.s32 %s14, 1
      %s20 = ssub.s32 %s14, 2
      %s21 = sadd.s32 %s14, 1
      %s22 = ssub.s32 %s14, %s21
      %p23 = scmp.eq.s32.totalorder %s22, 0
      %s25 = sadd.s32 %s24, 1
      %s26 = scalar_select %p23, %s24, %s25
      %p29 = pneg %p23
      %p30 = scmp.eq.s32.totalorder %s14, 1
      %p31 = por %p29, %p30
      %p32 = scmp.ne.s32.totalorder %s24, %s27
      %p33 = scmp.eq.s32.totalorder %s14, 0
      %p34 = por %p32, %p33
      %p35 = scmp.ne.s32.totalorder %s24, %s27
      %p36 = scmp.eq.s32.totalorder %s19, 1
      %p37 = por %p35, %p36
      %p38 = scmp.ne.s32.totalorder %s27, %s28
      %p39 = scmp.eq.s32.totalorder %s19, 0
      %p40 = por %p38, %p39
      %p41 = scmp.ne.s32.totalorder %s27, %s28
      %p42 = scmp.eq.s32.totalorder %s20, 1
      %p43 = por %p41, %p42
      %p45 = scmp.ne.s32.totalorder %s28, %s44
      %p46 = scmp.eq.s32.totalorder %s20, 0
      %p47 = por %p45, %p46
      %s49 = sadd.s32 %s48, 1
      %p52 = scmp.eq.s32.totalorder %s14, 1
      %p53 = scmp.ne.s32.totalorder %s48, %s50
      %p54 = scmp.eq.s32.totalorder %s14, 0
      %p55 = por %p53, %p54
      %p56 = scmp.ne.s32.totalorder %s48, %s50
      %p57 = scmp.eq.s32.totalorder %s19, 1
      %p58 = por %p56, %p57
      %p59 = scmp.ne.s32.totalorder %s50, %s51
      %p60 = scmp.eq.s32.totalorder %s19, 0
      %p61 = por %p59, %p60
      %p62 = scmp.ne.s32.totalorder %s50, %s51
      %p63 = scmp.eq.s32.totalorder %s20, 1
      %p64 = por %p62, %p63
      %p66 = scmp.ne.s32.totalorder %s51, %s65
      %p67 = scmp.eq.s32.totalorder %s20, 0
      %p68 = por %p66, %p67
      %s70 = sadd.s32 %s69, 1
      %p73 = scmp.eq.s32.totalorder %s14, 1
      %p74 = scmp.ne.s32.totalorder %s69, %s71
      %p75 = scmp.eq.s32.totalorder %s14, 0
      %p76 = por %p74, %p75
      %p77 = scmp.ne.s32.totalorder %s69, %s71
      %p78 = scmp.eq.s32.totalorder %s19, 1
      %p79 = por %p77, %p78
      %p80 = scmp.ne.s32.totalorder %s71, %s72
      %p81 = scmp.eq.s32.totalorder %s19, 0
      %p82 = por %p80, %p81
      %p83 = scmp.ne.s32.totalorder %s71, %s72
      %p84 = scmp.eq.s32.totalorder %s20, 1
      %p85 = por %p83, %p84
      %p87 = scmp.ne.s32.totalorder %s72, %s86
      %p88 = scmp.eq.s32.totalorder %s20, 0
      %p89 = por %p87, %p88
      %s91 = sadd.s32 %s90, 1
      %p94 = scmp.eq.s32.totalorder %s14, 1
      %p95 = scmp.ne.s32.totalorder %s90, %s92
      %p96 = scmp.eq.s32.totalorder %s14, 0
      %p97 = por %p95, %p96
      %p98 = scmp.ne.s32.totalorder %s90, %s92
      %p99 = scmp.eq.s32.totalorder %s19, 1
      %p100 = por %p98, %p99
      %p101 = scmp.ne.s32.totalorder %s92, %s93
      %p102 = scmp.eq.s32.totalorder %s19, 0
      %p103 = por %p101, %p102
      %p104 = scmp.ne.s32.totalorder %s92, %s93
      %p105 = scmp.eq.s32.totalorder %s20, 1
      %p106 = por %p104, %p105
      %p108 = scmp.ne.s32.totalorder %s93, %s107
      %p109 = scmp.eq.s32.totalorder %s20, 0
      %p110 = por %p108, %p109
      %s112 = sadd.s32 %s111, 1
      %p115 = scmp.eq.s32.totalorder %s14, 1
      %p116 = scmp.ne.s32.totalorder %s111, %s113
      %p117 = scmp.eq.s32.totalorder %s14, 0
      %p118 = por %p116, %p117
      %p119 = scmp.ne.s32.totalorder %s111, %s113
      %p120 = scmp.eq.s32.totalorder %s19, 1
      %p121 = por %p119, %p120
      %p122 = scmp.ne.s32.totalorder %s113, %s114
      %p123 = scmp.eq.s32.totalorder %s19, 0
      %p124 = por %p122, %p123
      %p125 = scmp.ne.s32.totalorder %s113, %s114
      %p126 = scmp.eq.s32.totalorder %s20, 1
      %p127 = por %p125, %p126
      %p129 = scmp.ne.s32.totalorder %s114, %s128
      %p130 = scmp.eq.s32.totalorder %s20, 0
      %p131 = por %p129, %p130
      %s132 = ssub.s32 %s14, %s21
      %p133 = scmp.eq.s32.totalorder %s132, 0
      %s135 = sadd.s32 %s134, 1
      %s136 = scalar_select %p133, %s134, %s135
      %p139 = pneg %p133
      %p140 = scmp.eq.s32.totalorder %s14, 1
      %p141 = por %p139, %p140
      %p142 = scmp.ne.s32.totalorder %s134, %s137
      %p143 = scmp.eq.s32.totalorder %s14, 0
      %p144 = por %p142, %p143
      %p145 = scmp.ne.s32.totalorder %s134, %s137
      %p146 = scmp.eq.s32.totalorder %s19, 1
      %p147 = por %p145, %p146
      %p148 = scmp.ne.s32.totalorder %s137, %s138
      %p149 = scmp.eq.s32.totalorder %s19, 0
      %p150 = por %p148, %p149
      %p151 = scmp.ne.s32.totalorder %s137, %s138
      %p152 = scmp.eq.s32.totalorder %s20, 1
      %p153 = por %p151, %p152
      %p155 = scmp.ne.s32.totalorder %s138, %s154
      %p156 = scmp.eq.s32.totalorder %s20, 0
      %p157 = por %p155, %p156
      %p158 = scmp.le.s32.totalorder 1, %s14
      %p159 = scmp.lt.s32.totalorder %s14, 3
      %p160 = pnand %p158, %p159
      %p161 = pneg %p160
      // Predicated region
      $region9: #{tpu_custom_call.1} parent=5 // pred_check
        _
      $region10: #{tpu_custom_call.1} parent=5 // pred_check_branch
        %163 = sbr.rel (%p160) target = $region12
      $region11: #{tpu_custom_call.1} parent=5 // pred_region
        %s164 = ssub.s32 %s14, 1
        // Predicated region
        $region13: #{tpu_custom_call.1} parent=11 // pred_check
          %p165 = pneg %p61
        $region14: #{tpu_custom_call.1} parent=11 // pred_check_branch
          %167 = sbr.rel (%p165) target = $region16
        $region15: #{tpu_custom_call.1} parent=11 // pred_region
          _
        $region16: #{tpu_custom_call.1} parent=11 // pred_fallthru
          _
        // Predicated region
        $region17: #{tpu_custom_call.1} parent=11 // pred_check
          %p168 = pneg %p82
        $region18: #{tpu_custom_call.1} parent=11 // pred_check_branch
          %170 = sbr.rel (%p168) target = $region20
        $region19: #{tpu_custom_call.1} parent=11 // pred_region
          _
        $region20: #{tpu_custom_call.1} parent=11 // pred_fallthru
          _
        // Predicated region
        $region21: #{tpu_custom_call.1} parent=11 // pred_check
          %p171 = pneg %p103
        $region22: #{tpu_custom_call.1} parent=11 // pred_check_branch
          %173 = sbr.rel (%p171) target = $region24
        $region23: #{tpu_custom_call.1} parent=11 // pred_region
          _
        $region24: #{tpu_custom_call.1} parent=11 // pred_fallthru
          _
        // Predicated region
        $region25: #{tpu_custom_call.1} parent=11 // pred_check
          %p174 = pneg %p124
        $region26: #{tpu_custom_call.1} parent=11 // pred_check_branch
          %176 = sbr.rel (%p174) target = $region28
        $region27: #{tpu_custom_call.1} parent=11 // pred_region
          _
        $region28: #{tpu_custom_call.1} parent=11 // pred_fallthru
          _
      $region12: #{tpu_custom_call.1} parent=5 // pred_fallthru
        _
      %p177 = scmp.lt.s32.totalorder %s14, 2
      // Predicated region
      $region29: #{tpu_custom_call.1} parent=5 // pred_check
        %p178 = pneg %p177
      $region30: #{tpu_custom_call.1} parent=5 // pred_check_branch
        %180 = sbr.rel (%p178) target = $region32
      $region31: #{tpu_custom_call.1} parent=5 // pred_region
        // Predicated region
        $region33: #{tpu_custom_call.1} parent=31 // pred_check
          %p181 = pneg %p34
        $region34: #{tpu_custom_call.1} parent=31 // pred_check_branch
          %183 = sbr.rel (%p181) target = $region36
        $region35: #{tpu_custom_call.1} parent=31 // pred_region
          %p184 = scmp.lt.s32.totalorder %s14, 1
          %s185 = scalar_select %p184, %s14, 1
          %s186 = smul.addr %s185, 2
          %s187 = smul.addr %s186, 4
          %s188 = scalar_lea.vmem %s0, %s187
        $region36: #{tpu_custom_call.1} parent=31 // pred_fallthru
          _
      $region32: #{tpu_custom_call.1} parent=5 // pred_fallthru
        _
      %p189 = scmp.le.s32.totalorder 1, %s14
      %p190 = scmp.lt.s32.totalorder %s14, 3
      %p191 = pnand %p189, %p190
      %p192 = pneg %p191
      // Predicated region
      $region37: #{tpu_custom_call.1} parent=5 // pred_check
        _
      $region38: #{tpu_custom_call.1} parent=5 // pred_check_branch
        %194 = sbr.rel (%p191) target = $region40
      $region39: #{tpu_custom_call.1} parent=5 // pred_region
        %s195 = ssub.s32 %s14, 1
        %p196 = scmp.lt.s32.totalorder %s19, 1
        %s197 = scalar_select %p196, %s19, 1
        %s198 = smul.addr %s197, 2
        %s199 = smul.addr %s198, 4
        %s200 = scalar_lea.vmem %s0, %s199
        %p201 = pneg %p40
        %p202 = pneg %p37
        %p203 = pneg %p61
        %p204 = pneg %p58
        %p205 = pneg %p82
        %p206 = pneg %p79
        %p207 = pneg %p103
        %p208 = pneg %p100
        %p209 = pneg %p124
        %p210 = pneg %p121
        %p211 = pneg %p150
        %p212 = pneg %p147
        %s213 = sand.u32 %s137, 1
        %s214 = scalar_lea.sflag [#allocation3], %s213
        %s215 = sand.u32 %s137, 1
        %s216 = smul.addr %s215, 8
        %s217 = scalar_lea.vmem [#allocation2], %s216
        %p218 = scmp.lt.s32.totalorder %s19, 1
        %s219 = scalar_select %p218, %s19, 1
        %s220 = smul.addr %s219, 2
        %s221 = smul.addr %s220, 4
        %s222 = scalar_lea.vmem %s0, %s221
        %v223 = vld [vmem:[%s222] sm:$0xff]
        %v224 = vlaneseq
        %v225 = vand.u32 %v224, 127
        %v226 = vadd.s32 %v225, 128
        %v227 = vand.u32 %v225, 15
        %v228 = vand.u32 %v226, 15
        %v230 = vcombine.high %v223, %v223
        %232 = vrot.lane.b32.xlu0 %v223, 17
        %v233 = vpop.permute.xlu0 %232
        %234 = vrot.lane.b32.xlu0 %v230, 17
        %v235 = vpop.permute.xlu0 %234
        %vm236 = vcmp.lt.s32.totalorder %v225, 17
        %v237 = vsel %vm236, %v233, %v235
        %v238 = vsel %vm236, %v235, %v233
        %vm239 = vcmp.ge.s32.totalorder %v225, 16
        %vm240 = vcmp.ge.s32.totalorder %v226, 16
        %vm241 = vcmp.ge.s32.totalorder %v227, 1
        %vm242 = vcmp.ge.s32.totalorder %v228, 1
        %vm243 = vmand %vm239, %vm241
        %vm244 = vmand %vm240, %vm242
        %v245 = vsel %vm243, %v238, 0.0
        %v246 = vsel %vm244, %v237, 0.0
        %v247 = vld [vmem:[%s1] sm:$0x3f]
        %248 = vrot.lane.b32.xlu0 %v223, 16
        %v249 = vpop.permute.xlu0 %248
        %250 = vrot.lane.b32.xlu0 %v230, 16
        %v251 = vpop.permute.xlu0 %250
        %vm252 = vcmp.lt.s32.totalorder %v225, 16
        %v253 = vsel %vm252, %v249, %v251
        %v254 = vsel %vm252, %v251, %v249
        %v255 = vsel %vm239, %v254, 0.0
        %v256 = vsel %vm240, %v253, 0.0
        %s257 = scalar_lea.vmem %s1, 8
        %v258 = vld [vmem:[%s257] sm:$0x3f]
        %vm259 = vcmask 31744
        %v261 = vsel %vm259, %v258, 0
        %vm263 = vcmask 1043456
        %v265 = vsel %vm263, %v255, 0
        %v268 = vsel %vm263, %v256, 0
        %270 = vmatprep.subr.mxu0 0.0
        %271 = vmatpush1.msra.mxu0 0.0
        %272 = vmatprep.subr.mxu0 0.0
        %273 = vmatpush1.msra.mxu0 0.0
        %274 = vmatprep.subr.mxu0 0.0
        %275 = vmatpush1.msra.mxu0 0.0
        %276 = vmatprep.subr.mxu0 0.0
        %277 = vmatpush1.msra.mxu0 0.0
        %278 = vmatprep.subr.mxu0 0.0
        %279 = vmatpush1.msra.mxu0 0.0
        %280 = vmatprep.subr.mxu0 0.0
        %281 = vmatpush1.msra.mxu0 0.0
        %282 = vmatprep.subr.mxu0 0.0
        %283 = vmatpush1.msra.mxu0 0.0
        %284 = vmatprep.subr.mxu0 0.0
        %285 = vmatpush1.msra.mxu0 0.0
        %286 = vmatprep.subr.mxu0 0.0
        %287 = vmatpush1.msra.mxu0 0.0
        %288 = vmatprep.subr.mxu0 0.0
        %289 = vmatpush1.msra.mxu0 0.0
        %290 = vmatprep.subr.mxu0 0.0
        %291 = vmatpush1.msra.mxu0 0.0
        %292 = vmatprep.subr.mxu0 0.0
        %293 = vmatpush1.msra.mxu0 0.0
        %294 = vmatprep.subr.mxu0 0.0
        %295 = vmatpush1.msra.mxu0 0.0
        %296 = vmatprep.subr.mxu0 0.0
        %297 = vmatpush1.msra.mxu0 0.0
        %298 = vmatprep.subr.mxu0 0.0
        %299 = vmatpush1.msra.mxu0 0.0
        %300 = vmatprep.subr.mxu0 %v268
        %301 = vmatpush1.msra.mxu0 %v265
        %302 = vmatprep.subr.mxu0 0.0
        %303 = vmatpush2.msra.mxu0 0.0
        %304 = vmatprep.subr.mxu0 0.0
        %305 = vmatpush2.msra.mxu0 0.0
        %306 = vmatprep.subr.mxu0 0.0
        %307 = vmatpush2.msra.mxu0 0.0
        %308 = vmatprep.subr.mxu0 0.0
        %309 = vmatpush2.msra.mxu0 0.0
        %310 = vmatprep.subr.mxu0 0.0
        %311 = vmatpush2.msra.mxu0 0.0
        %312 = vmatprep.subr.mxu0 0.0
        %313 = vmatpush2.msra.mxu0 0.0
        %314 = vmatprep.subr.mxu0 0.0
        %315 = vmatpush2.msra.mxu0 0.0
        %316 = vmatprep.subr.mxu0 0.0
        %317 = vmatpush2.msra.mxu0 0.0
        %318 = vmatprep.subr.mxu0 0.0
        %319 = vmatpush2.msra.mxu0 0.0
        %320 = vmatprep.subr.mxu0 0.0
        %321 = vmatpush2.msra.mxu0 0.0
        %322 = vmatprep.subr.mxu0 0.0
        %323 = vmatpush2.msra.mxu0 0.0
        %324 = vmatprep.subr.mxu0 0.0
        %325 = vmatpush2.msra.mxu0 0.0
        %326 = vmatprep.subr.mxu0 0.0
        %327 = vmatpush2.msra.mxu0 0.0
        %328 = vmatprep.subr.mxu0 0.0
        %329 = vmatpush2.msra.mxu0 0.0
        %330 = vmatprep.subr.mxu0 0.0
        %331 = vmatpush2.msra.mxu0 0.0
        %332 = vmatprep.subr.mxu0 0.0
        %333 = vmatpush2.msra.mxu0 0.0
        %334 = vmatprep.mubr.f32.mxu0 0.0
        %335 = vmatmul.mubr.f32.gmra.mxu0 %v261
        %v336 = vpop.f32.mrf.mxu0
        %v337 = vadd.f32 0.0, %v336
        %v338 = vpop.f32.mrf.mxu0
        %v339 = vadd.f32 0.0, %v338
        %340 = vdwg.mxu0
        %v342 = vsel %vm259, %v247, 0
        %v345 = vsel %vm263, %v245, 0
        %v348 = vsel %vm263, %v246, 0
        %350 = vmatprep.subr.mxu0 0.0
        %351 = vmatpush1.msra.mxu0 0.0
        %352 = vmatprep.subr.mxu0 0.0
        %353 = vmatpush1.msra.mxu0 0.0
        %354 = vmatprep.subr.mxu0 0.0
        %355 = vmatpush1.msra.mxu0 0.0
        %356 = vmatprep.subr.mxu0 0.0
        %357 = vmatpush1.msra.mxu0 0.0
        %358 = vmatprep.subr.mxu0 0.0
        %359 = vmatpush1.msra.mxu0 0.0
        %360 = vmatprep.subr.mxu0 0.0
        %361 = vmatpush1.msra.mxu0 0.0
        %362 = vmatprep.subr.mxu0 0.0
        %363 = vmatpush1.msra.mxu0 0.0
        %364 = vmatprep.subr.mxu0 0.0
        %365 = vmatpush1.msra.mxu0 0.0
        %366 = vmatprep.subr.mxu0 0.0
        %367 = vmatpush1.msra.mxu0 0.0
        %368 = vmatprep.subr.mxu0 0.0
        %369 = vmatpush1.msra.mxu0 0.0
        %370 = vmatprep.subr.mxu0 0.0
        %371 = vmatpush1.msra.mxu0 0.0
        %372 = vmatprep.subr.mxu0 0.0
        %373 = vmatpush1.msra.mxu0 0.0
        %374 = vmatprep.subr.mxu0 0.0
        %375 = vmatpush1.msra.mxu0 0.0
        %376 = vmatprep.subr.mxu0 0.0
        %377 = vmatpush1.msra.mxu0 0.0
        %378 = vmatprep.subr.mxu0 0.0
        %379 = vmatpush1.msra.mxu0 0.0
        %380 = vmatprep.subr.mxu0 %v348
        %381 = vmatpush1.msra.mxu0 %v345
        %382 = vmatprep.subr.mxu0 0.0
        %383 = vmatpush2.msra.mxu0 0.0
        %384 = vmatprep.subr.mxu0 0.0
        %385 = vmatpush2.msra.mxu0 0.0
        %386 = vmatprep.subr.mxu0 0.0
        %387 = vmatpush2.msra.mxu0 0.0
        %388 = vmatprep.subr.mxu0 0.0
        %389 = vmatpush2.msra.mxu0 0.0
        %390 = vmatprep.subr.mxu0 0.0
        %391 = vmatpush2.msra.mxu0 0.0
        %392 = vmatprep.subr.mxu0 0.0
        %393 = vmatpush2.msra.mxu0 0.0
        %394 = vmatprep.subr.mxu0 0.0
        %395 = vmatpush2.msra.mxu0 0.0
        %396 = vmatprep.subr.mxu0 0.0
        %397 = vmatpush2.msra.mxu0 0.0
        %398 = vmatprep.subr.mxu0 0.0
        %399 = vmatpush2.msra.mxu0 0.0
        %400 = vmatprep.subr.mxu0 0.0
        %401 = vmatpush2.msra.mxu0 0.0
        %402 = vmatprep.subr.mxu0 0.0
        %403 = vmatpush2.msra.mxu0 0.0
        %404 = vmatprep.subr.mxu0 0.0
        %405 = vmatpush2.msra.mxu0 0.0
        %406 = vmatprep.subr.mxu0 0.0
        %407 = vmatpush2.msra.mxu0 0.0
        %408 = vmatprep.subr.mxu0 0.0
        %409 = vmatpush2.msra.mxu0 0.0
        %410 = vmatprep.subr.mxu0 0.0
        %411 = vmatpush2.msra.mxu0 0.0
        %412 = vmatprep.subr.mxu0 0.0
        %413 = vmatpush2.msra.mxu0 0.0
        %414 = vmatprep.mubr.f32.mxu0 0.0
        %415 = vmatmul.mubr.f32.gmra.mxu0 %v342
        %v416 = vpop.f32.mrf.mxu0
        %v417 = vadd.f32 %v337, %v416
        %v418 = vpop.f32.mrf.mxu0
        %v419 = vadd.f32 %v339, %v418
        %420 = vdwg.mxu0
        %421 = vrot.lane.b32.xlu0 %v223, 15
        %v422 = vpop.permute.xlu0 %421
        %423 = vrot.lane.b32.xlu0 %v230, 15
        %v424 = vpop.permute.xlu0 %423
        %vm425 = vcmp.lt.s32.totalorder %v225, 15
        %v426 = vsel %vm425, %v422, %v424
        %v427 = vsel %vm425, %v424, %v422
        %vm428 = vcmp.lt.s32.totalorder %v227, 15
        %vm429 = vcmp.lt.s32.totalorder %v228, 15
        %vm430 = vmand %vm239, %vm428
        %vm431 = vmand %vm240, %vm429
        %v432 = vsel %vm430, %v427, 0.0
        %v433 = vsel %vm431, %v426, 0.0
        %s434 = scalar_lea.vmem %s1, 16
        %v435 = vld [vmem:[%s434] sm:$0x3f]
        %v437 = vsel %vm259, %v435, 0
        %v440 = vsel %vm263, %v432, 0
        %v443 = vsel %vm263, %v433, 0
        %445 = vmatprep.subr.mxu0 0.0
        %446 = vmatpush1.msra.mxu0 0.0
        %447 = vmatprep.subr.mxu0 0.0
        %448 = vmatpush1.msra.mxu0 0.0
        %449 = vmatprep.subr.mxu0 0.0
        %450 = vmatpush1.msra.mxu0 0.0
        %451 = vmatprep.subr.mxu0 0.0
        %452 = vmatpush1.msra.mxu0 0.0
        %453 = vmatprep.subr.mxu0 0.0
        %454 = vmatpush1.msra.mxu0 0.0
        %455 = vmatprep.subr.mxu0 0.0
        %456 = vmatpush1.msra.mxu0 0.0
        %457 = vmatprep.subr.mxu0 0.0
        %458 = vmatpush1.msra.mxu0 0.0
        %459 = vmatprep.subr.mxu0 0.0
        %460 = vmatpush1.msra.mxu0 0.0
        %461 = vmatprep.subr.mxu0 0.0
        %462 = vmatpush1.msra.mxu0 0.0
        %463 = vmatprep.subr.mxu0 0.0
        %464 = vmatpush1.msra.mxu0 0.0
        %465 = vmatprep.subr.mxu0 0.0
        %466 = vmatpush1.msra.mxu0 0.0
        %467 = vmatprep.subr.mxu0 0.0
        %468 = vmatpush1.msra.mxu0 0.0
        %469 = vmatprep.subr.mxu0 0.0
        %470 = vmatpush1.msra.mxu0 0.0
        %471 = vmatprep.subr.mxu0 0.0
        %472 = vmatpush1.msra.mxu0 0.0
        %473 = vmatprep.subr.mxu0 0.0
        %474 = vmatpush1.msra.mxu0 0.0
        %475 = vmatprep.subr.mxu0 %v443
        %476 = vmatpush1.msra.mxu0 %v440
        %477 = vmatprep.subr.mxu0 0.0
        %478 = vmatpush2.msra.mxu0 0.0
        %479 = vmatprep.subr.mxu0 0.0
        %480 = vmatpush2.msra.mxu0 0.0
        %481 = vmatprep.subr.mxu0 0.0
        %482 = vmatpush2.msra.mxu0 0.0
        %483 = vmatprep.subr.mxu0 0.0
        %484 = vmatpush2.msra.mxu0 0.0
        %485 = vmatprep.subr.mxu0 0.0
        %486 = vmatpush2.msra.mxu0 0.0
        %487 = vmatprep.subr.mxu0 0.0
        %488 = vmatpush2.msra.mxu0 0.0
        %489 = vmatprep.subr.mxu0 0.0
        %490 = vmatpush2.msra.mxu0 0.0
        %491 = vmatprep.subr.mxu0 0.0
        %492 = vmatpush2.msra.mxu0 0.0
        %493 = vmatprep.subr.mxu0 0.0
        %494 = vmatpush2.msra.mxu0 0.0
        %495 = vmatprep.subr.mxu0 0.0
        %496 = vmatpush2.msra.mxu0 0.0
        %497 = vmatprep.subr.mxu0 0.0
        %498 = vmatpush2.msra.mxu0 0.0
        %499 = vmatprep.subr.mxu0 0.0
        %500 = vmatpush2.msra.mxu0 0.0
        %501 = vmatprep.subr.mxu0 0.0
        %502 = vmatpush2.msra.mxu0 0.0
        %503 = vmatprep.subr.mxu0 0.0
        %504 = vmatpush2.msra.mxu0 0.0
        %505 = vmatprep.subr.mxu0 0.0
        %506 = vmatpush2.msra.mxu0 0.0
        %507 = vmatprep.subr.mxu0 0.0
        %508 = vmatpush2.msra.mxu0 0.0
        %509 = vmatprep.mubr.f32.mxu0 0.0
        %510 = vmatmul.mubr.f32.gmra.mxu0 %v437
        %v511 = vpop.f32.mrf.mxu0
        %v512 = vadd.f32 0.0, %v511
        %v513 = vpop.f32.mrf.mxu0
        %v514 = vadd.f32 0.0, %v513
        %515 = vdwg.mxu0
        %v516 = vadd.f32 %v417, %v512
        %v517 = vadd.f32 %v419, %v514
        %518 = vrot.lane.b32.xlu0 %v223, 1
        %v519 = vpop.permute.xlu0 %518
        %520 = vrot.lane.b32.xlu0 %v230, 1
        %v521 = vpop.permute.xlu0 %520
        %vm522 = vcmp.lt.s32.totalorder %v225, 1
        %v523 = vsel %vm522, %v519, %v521
        %v524 = vsel %vm522, %v521, %v519
        %v525 = vsel %vm241, %v524, 0.0
        %v526 = vsel %vm242, %v523, 0.0
        %s527 = scalar_lea.vmem %s1, 24
        %v528 = vld [vmem:[%s527] sm:$0x3f]
        %v530 = vsel %vm259, %v528, 0
        %v533 = vsel %vm263, %v525, 0
        %v536 = vsel %vm263, %v526, 0
        %538 = vmatprep.subr.mxu0 0.0
        %539 = vmatpush1.msra.mxu0 0.0
        %540 = vmatprep.subr.mxu0 0.0
        %541 = vmatpush1.msra.mxu0 0.0
        %542 = vmatprep.subr.mxu0 0.0
        %543 = vmatpush1.msra.mxu0 0.0
        %544 = vmatprep.subr.mxu0 0.0
        %545 = vmatpush1.msra.mxu0 0.0
        %546 = vmatprep.subr.mxu0 0.0
        %547 = vmatpush1.msra.mxu0 0.0
        %548 = vmatprep.subr.mxu0 0.0
        %549 = vmatpush1.msra.mxu0 0.0
        %550 = vmatprep.subr.mxu0 0.0
        %551 = vmatpush1.msra.mxu0 0.0
        %552 = vmatprep.subr.mxu0 0.0
        %553 = vmatpush1.msra.mxu0 0.0
        %554 = vmatprep.subr.mxu0 0.0
        %555 = vmatpush1.msra.mxu0 0.0
        %556 = vmatprep.subr.mxu0 0.0
        %557 = vmatpush1.msra.mxu0 0.0
        %558 = vmatprep.subr.mxu0 0.0
        %559 = vmatpush1.msra.mxu0 0.0
        %560 = vmatprep.subr.mxu0 0.0
        %561 = vmatpush1.msra.mxu0 0.0
        %562 = vmatprep.subr.mxu0 0.0
        %563 = vmatpush1.msra.mxu0 0.0
        %564 = vmatprep.subr.mxu0 0.0
        %565 = vmatpush1.msra.mxu0 0.0
        %566 = vmatprep.subr.mxu0 0.0
        %567 = vmatpush1.msra.mxu0 0.0
        %568 = vmatprep.subr.mxu0 %v536
        %569 = vmatpush1.msra.mxu0 %v533
        %570 = vmatprep.subr.mxu0 0.0
        %571 = vmatpush2.msra.mxu0 0.0
        %572 = vmatprep.subr.mxu0 0.0
        %573 = vmatpush2.msra.mxu0 0.0
        %574 = vmatprep.subr.mxu0 0.0
        %575 = vmatpush2.msra.mxu0 0.0
        %576 = vmatprep.subr.mxu0 0.0
        %577 = vmatpush2.msra.mxu0 0.0
        %578 = vmatprep.subr.mxu0 0.0
        %579 = vmatpush2.msra.mxu0 0.0
        %580 = vmatprep.subr.mxu0 0.0
        %581 = vmatpush2.msra.mxu0 0.0
        %582 = vmatprep.subr.mxu0 0.0
        %583 = vmatpush2.msra.mxu0 0.0
        %584 = vmatprep.subr.mxu0 0.0
        %585 = vmatpush2.msra.mxu0 0.0
        %586 = vmatprep.subr.mxu0 0.0
        %587 = vmatpush2.msra.mxu0 0.0
        %588 = vmatprep.subr.mxu0 0.0
        %589 = vmatpush2.msra.mxu0 0.0
        %590 = vmatprep.subr.mxu0 0.0
        %591 = vmatpush2.msra.mxu0 0.0
        %592 = vmatprep.subr.mxu0 0.0
        %593 = vmatpush2.msra.mxu0 0.0
        %594 = vmatprep.subr.mxu0 0.0
        %595 = vmatpush2.msra.mxu0 0.0
        %596 = vmatprep.subr.mxu0 0.0
        %597 = vmatpush2.msra.mxu0 0.0
        %598 = vmatprep.subr.mxu0 0.0
        %599 = vmatpush2.msra.mxu0 0.0
        %600 = vmatprep.subr.mxu0 0.0
        %601 = vmatpush2.msra.mxu0 0.0
        %602 = vmatprep.mubr.f32.mxu0 0.0
        %603 = vmatmul.mubr.f32.gmra.mxu0 %v530
        %v604 = vpop.f32.mrf.mxu0
        %v605 = vadd.f32 0.0, %v604
        %v606 = vpop.f32.mrf.mxu0
        %v607 = vadd.f32 0.0, %v606
        %608 = vdwg.mxu0
        %v609 = vadd.f32 %v516, %v605
        %v610 = vadd.f32 %v517, %v607
        %s611 = scalar_lea.vmem %s1, 32
        %v612 = vld [vmem:[%s611] sm:$0x3f]
        %v614 = vsel %vm259, %v612, 0
        %v616 = vsel %vm263, %v223, 0
        %v618 = vsel %vm263, %v230, 0
        %620 = vmatprep.subr.mxu0 0.0
        %621 = vmatpush1.msra.mxu0 0.0
        %622 = vmatprep.subr.mxu0 0.0
        %623 = vmatpush1.msra.mxu0 0.0
        %624 = vmatprep.subr.mxu0 0.0
        %625 = vmatpush1.msra.mxu0 0.0
        %626 = vmatprep.subr.mxu0 0.0
        %627 = vmatpush1.msra.mxu0 0.0
        %628 = vmatprep.subr.mxu0 0.0
        %629 = vmatpush1.msra.mxu0 0.0
        %630 = vmatprep.subr.mxu0 0.0
        %631 = vmatpush1.msra.mxu0 0.0
        %632 = vmatprep.subr.mxu0 0.0
        %633 = vmatpush1.msra.mxu0 0.0
        %634 = vmatprep.subr.mxu0 0.0
        %635 = vmatpush1.msra.mxu0 0.0
        %636 = vmatprep.subr.mxu0 0.0
        %637 = vmatpush1.msra.mxu0 0.0
        %638 = vmatprep.subr.mxu0 0.0
        %639 = vmatpush1.msra.mxu0 0.0
        %640 = vmatprep.subr.mxu0 0.0
        %641 = vmatpush1.msra.mxu0 0.0
        %642 = vmatprep.subr.mxu0 0.0
        %643 = vmatpush1.msra.mxu0 0.0
        %644 = vmatprep.subr.mxu0 0.0
        %645 = vmatpush1.msra.mxu0 0.0
        %646 = vmatprep.subr.mxu0 0.0
        %647 = vmatpush1.msra.mxu0 0.0
        %648 = vmatprep.subr.mxu0 0.0
        %649 = vmatpush1.msra.mxu0 0.0
        %650 = vmatprep.subr.mxu0 %v618
        %651 = vmatpush1.msra.mxu0 %v616
        %652 = vmatprep.subr.mxu0 0.0
        %653 = vmatpush2.msra.mxu0 0.0
        %654 = vmatprep.subr.mxu0 0.0
        %655 = vmatpush2.msra.mxu0 0.0
        %656 = vmatprep.subr.mxu0 0.0
        %657 = vmatpush2.msra.mxu0 0.0
        %658 = vmatprep.subr.mxu0 0.0
        %659 = vmatpush2.msra.mxu0 0.0
        %660 = vmatprep.subr.mxu0 0.0
        %661 = vmatpush2.msra.mxu0 0.0
        %662 = vmatprep.subr.mxu0 0.0
        %663 = vmatpush2.msra.mxu0 0.0
        %664 = vmatprep.subr.mxu0 0.0
        %665 = vmatpush2.msra.mxu0 0.0
        %666 = vmatprep.subr.mxu0 0.0
        %667 = vmatpush2.msra.mxu0 0.0
        %668 = vmatprep.subr.mxu0 0.0
        %669 = vmatpush2.msra.mxu0 0.0
        %670 = vmatprep.subr.mxu0 0.0
        %671 = vmatpush2.msra.mxu0 0.0
        %672 = vmatprep.subr.mxu0 0.0
        %673 = vmatpush2.msra.mxu0 0.0
        %674 = vmatprep.subr.mxu0 0.0
        %675 = vmatpush2.msra.mxu0 0.0
        %676 = vmatprep.subr.mxu0 0.0
        %677 = vmatpush2.msra.mxu0 0.0
        %678 = vmatprep.subr.mxu0 0.0
        %679 = vmatpush2.msra.mxu0 0.0
        %680 = vmatprep.subr.mxu0 0.0
        %681 = vmatpush2.msra.mxu0 0.0
        %682 = vmatprep.subr.mxu0 0.0
        %683 = vmatpush2.msra.mxu0 0.0
        %684 = vmatprep.mubr.f32.mxu0 0.0
        %685 = vmatmul.mubr.f32.gmra.mxu0 %v614
        %v686 = vpop.f32.mrf.mxu0
        %v687 = vadd.f32 0.0, %v686
        %v688 = vpop.f32.mrf.mxu0
        %v689 = vadd.f32 0.0, %v688
        %690 = vdwg.mxu0
        %v691 = vadd.f32 %v609, %v687
        %v692 = vadd.f32 %v610, %v689
        %693 = vrot.lane.b32.xlu0 %v223, 127
        %v694 = vpop.permute.xlu0 %693
        %695 = vrot.lane.b32.xlu0 %v230, 127
        %v696 = vpop.permute.xlu0 %695
        %vm697 = vcmp.lt.s32.totalorder %v225, 127
        %v698 = vsel %vm697, %v694, %v696
        %v699 = vsel %vm697, %v696, %v694
        %v700 = vsel %vm428, %v698, 0.0
        %v701 = vsel %vm429, %v699, 0.0
        %s702 = scalar_lea.vmem %s1, 40
        %v703 = vld [vmem:[%s702] sm:$0x3f]
        %v705 = vsel %vm259, %v703, 0
        %v708 = vsel %vm263, %v700, 0
        %v711 = vsel %vm263, %v701, 0
        %713 = vmatprep.subr.mxu0 0.0
        %714 = vmatpush1.msra.mxu0 0.0
        %715 = vmatprep.subr.mxu0 0.0
        %716 = vmatpush1.msra.mxu0 0.0
        %717 = vmatprep.subr.mxu0 0.0
        %718 = vmatpush1.msra.mxu0 0.0
        %719 = vmatprep.subr.mxu0 0.0
        %720 = vmatpush1.msra.mxu0 0.0
        %721 = vmatprep.subr.mxu0 0.0
        %722 = vmatpush1.msra.mxu0 0.0
        %723 = vmatprep.subr.mxu0 0.0
        %724 = vmatpush1.msra.mxu0 0.0
        %725 = vmatprep.subr.mxu0 0.0
        %726 = vmatpush1.msra.mxu0 0.0
        %727 = vmatprep.subr.mxu0 0.0
        %728 = vmatpush1.msra.mxu0 0.0
        %729 = vmatprep.subr.mxu0 0.0
        %730 = vmatpush1.msra.mxu0 0.0
        %731 = vmatprep.subr.mxu0 0.0
        %732 = vmatpush1.msra.mxu0 0.0
        %733 = vmatprep.subr.mxu0 0.0
        %734 = vmatpush1.msra.mxu0 0.0
        %735 = vmatprep.subr.mxu0 0.0
        %736 = vmatpush1.msra.mxu0 0.0
        %737 = vmatprep.subr.mxu0 0.0
        %738 = vmatpush1.msra.mxu0 0.0
        %739 = vmatprep.subr.mxu0 0.0
        %740 = vmatpush1.msra.mxu0 0.0
        %741 = vmatprep.subr.mxu0 0.0
        %742 = vmatpush1.msra.mxu0 0.0
        %743 = vmatprep.subr.mxu0 %v711
        %744 = vmatpush1.msra.mxu0 %v708
        %745 = vmatprep.subr.mxu0 0.0
        %746 = vmatpush2.msra.mxu0 0.0
        %747 = vmatprep.subr.mxu0 0.0
        %748 = vmatpush2.msra.mxu0 0.0
        %749 = vmatprep.subr.mxu0 0.0
        %750 = vmatpush2.msra.mxu0 0.0
        %751 = vmatprep.subr.mxu0 0.0
        %752 = vmatpush2.msra.mxu0 0.0
        %753 = vmatprep.subr.mxu0 0.0
        %754 = vmatpush2.msra.mxu0 0.0
        %755 = vmatprep.subr.mxu0 0.0
        %756 = vmatpush2.msra.mxu0 0.0
        %757 = vmatprep.subr.mxu0 0.0
        %758 = vmatpush2.msra.mxu0 0.0
        %759 = vmatprep.subr.mxu0 0.0
        %760 = vmatpush2.msra.mxu0 0.0
        %761 = vmatprep.subr.mxu0 0.0
        %762 = vmatpush2.msra.mxu0 0.0
        %763 = vmatprep.subr.mxu0 0.0
        %764 = vmatpush2.msra.mxu0 0.0
        %765 = vmatprep.subr.mxu0 0.0
        %766 = vmatpush2.msra.mxu0 0.0
        %767 = vmatprep.subr.mxu0 0.0
        %768 = vmatpush2.msra.mxu0 0.0
        %769 = vmatprep.subr.mxu0 0.0
        %770 = vmatpush2.msra.mxu0 0.0
        %771 = vmatprep.subr.mxu0 0.0
        %772 = vmatpush2.msra.mxu0 0.0
        %773 = vmatprep.subr.mxu0 0.0
        %774 = vmatpush2.msra.mxu0 0.0
        %775 = vmatprep.subr.mxu0 0.0
        %776 = vmatpush2.msra.mxu0 0.0
        %777 = vmatprep.mubr.f32.mxu0 0.0
        %778 = vmatmul.mubr.f32.gmra.mxu0 %v705
        %v779 = vpop.f32.mrf.mxu0
        %v780 = vadd.f32 0.0, %v779
        %v781 = vpop.f32.mrf.mxu0
        %v782 = vadd.f32 0.0, %v781
        %783 = vdwg.mxu0
        %v784 = vadd.f32 %v691, %v780
        %v785 = vadd.f32 %v692, %v782
        %786 = vrot.lane.b32.xlu0 %v223, 113
        %v787 = vpop.permute.xlu0 %786
        %788 = vrot.lane.b32.xlu0 %v230, 113
        %v789 = vpop.permute.xlu0 %788
        %vm790 = vcmp.lt.s32.totalorder %v225, 113
        %v791 = vsel %vm790, %v787, %v789
        %v792 = vsel %vm790, %v789, %v787
        %vm793 = vcmp.lt.s32.totalorder %v225, 240
        %vm794 = vcmp.lt.s32.totalorder %v226, 240
        %vm795 = vmand %vm793, %vm241
        %vm796 = vmand %vm794, %vm242
        %v797 = vsel %vm795, %v791, 0.0
        %v798 = vsel %vm796, %v792, 0.0
        %s799 = scalar_lea.vmem %s1, 48
        %v800 = vld [vmem:[%s799] sm:$0x3f]
        %v802 = vsel %vm259, %v800, 0
        %v805 = vsel %vm263, %v797, 0
        %v808 = vsel %vm263, %v798, 0
        %810 = vmatprep.subr.mxu0 0.0
        %811 = vmatpush1.msra.mxu0 0.0
        %812 = vmatprep.subr.mxu0 0.0
        %813 = vmatpush1.msra.mxu0 0.0
        %814 = vmatprep.subr.mxu0 0.0
        %815 = vmatpush1.msra.mxu0 0.0
        %816 = vmatprep.subr.mxu0 0.0
        %817 = vmatpush1.msra.mxu0 0.0
        %818 = vmatprep.subr.mxu0 0.0
        %819 = vmatpush1.msra.mxu0 0.0
        %820 = vmatprep.subr.mxu0 0.0
        %821 = vmatpush1.msra.mxu0 0.0
        %822 = vmatprep.subr.mxu0 0.0
        %823 = vmatpush1.msra.mxu0 0.0
        %824 = vmatprep.subr.mxu0 0.0
        %825 = vmatpush1.msra.mxu0 0.0
        %826 = vmatprep.subr.mxu0 0.0
        %827 = vmatpush1.msra.mxu0 0.0
        %828 = vmatprep.subr.mxu0 0.0
        %829 = vmatpush1.msra.mxu0 0.0
        %830 = vmatprep.subr.mxu0 0.0
        %831 = vmatpush1.msra.mxu0 0.0
        %832 = vmatprep.subr.mxu0 0.0
        %833 = vmatpush1.msra.mxu0 0.0
        %834 = vmatprep.subr.mxu0 0.0
        %835 = vmatpush1.msra.mxu0 0.0
        %836 = vmatprep.subr.mxu0 0.0
        %837 = vmatpush1.msra.mxu0 0.0
        %838 = vmatprep.subr.mxu0 0.0
        %839 = vmatpush1.msra.mxu0 0.0
        %840 = vmatprep.subr.mxu0 %v808
        %841 = vmatpush1.msra.mxu0 %v805
        %842 = vmatprep.subr.mxu0 0.0
        %843 = vmatpush2.msra.mxu0 0.0
        %844 = vmatprep.subr.mxu0 0.0
        %845 = vmatpush2.msra.mxu0 0.0
        %846 = vmatprep.subr.mxu0 0.0
        %847 = vmatpush2.msra.mxu0 0.0
        %848 = vmatprep.subr.mxu0 0.0
        %849 = vmatpush2.msra.mxu0 0.0
        %850 = vmatprep.subr.mxu0 0.0
        %851 = vmatpush2.msra.mxu0 0.0
        %852 = vmatprep.subr.mxu0 0.0
        %853 = vmatpush2.msra.mxu0 0.0
        %854 = vmatprep.subr.mxu0 0.0
        %855 = vmatpush2.msra.mxu0 0.0
        %856 = vmatprep.subr.mxu0 0.0
        %857 = vmatpush2.msra.mxu0 0.0
        %858 = vmatprep.subr.mxu0 0.0
        %859 = vmatpush2.msra.mxu0 0.0
        %860 = vmatprep.subr.mxu0 0.0
        %861 = vmatpush2.msra.mxu0 0.0
        %862 = vmatprep.subr.mxu0 0.0
        %863 = vmatpush2.msra.mxu0 0.0
        %864 = vmatprep.subr.mxu0 0.0
        %865 = vmatpush2.msra.mxu0 0.0
        %866 = vmatprep.subr.mxu0 0.0
        %867 = vmatpush2.msra.mxu0 0.0
        %868 = vmatprep.subr.mxu0 0.0
        %869 = vmatpush2.msra.mxu0 0.0
        %870 = vmatprep.subr.mxu0 0.0
        %871 = vmatpush2.msra.mxu0 0.0
        %872 = vmatprep.subr.mxu0 0.0
        %873 = vmatpush2.msra.mxu0 0.0
        %874 = vmatprep.mubr.f32.mxu0 0.0
        %875 = vmatmul.mubr.f32.gmra.mxu0 %v802
        %v876 = vpop.f32.mrf.mxu0
        %v877 = vadd.f32 0.0, %v876
        %v878 = vpop.f32.mrf.mxu0
        %v879 = vadd.f32 0.0, %v878
        %880 = vdwg.mxu0
        %v881 = vadd.f32 %v784, %v877
        %v882 = vadd.f32 %v785, %v879
        %883 = vrot.lane.b32.xlu0 %v223, 112
        %v884 = vpop.permute.xlu0 %883
        %885 = vrot.lane.b32.xlu0 %v230, 112
        %v886 = vpop.permute.xlu0 %885
        %vm887 = vcmp.lt.s32.totalorder %v225, 112
        %v888 = vsel %vm887, %v884, %v886
        %v889 = vsel %vm887, %v886, %v884
        %v890 = vsel %vm793, %v888, 0.0
        %v891 = vsel %vm794, %v889, 0.0
        %s892 = scalar_lea.vmem %s1, 56
        %v893 = vld [vmem:[%s892] sm:$0x3f]
        %v895 = vsel %vm259, %v893, 0
        %v898 = vsel %vm263, %v890, 0
        %v901 = vsel %vm263, %v891, 0
        %903 = vmatprep.subr.mxu0 0.0
        %904 = vmatpush1.msra.mxu0 0.0
        %905 = vmatprep.subr.mxu0 0.0
        %906 = vmatpush1.msra.mxu0 0.0
        %907 = vmatprep.subr.mxu0 0.0
        %908 = vmatpush1.msra.mxu0 0.0
        %909 = vmatprep.subr.mxu0 0.0
        %910 = vmatpush1.msra.mxu0 0.0
        %911 = vmatprep.subr.mxu0 0.0
        %912 = vmatpush1.msra.mxu0 0.0
        %913 = vmatprep.subr.mxu0 0.0
        %914 = vmatpush1.msra.mxu0 0.0
        %915 = vmatprep.subr.mxu0 0.0
        %916 = vmatpush1.msra.mxu0 0.0
        %917 = vmatprep.subr.mxu0 0.0
        %918 = vmatpush1.msra.mxu0 0.0
        %919 = vmatprep.subr.mxu0 0.0
        %920 = vmatpush1.msra.mxu0 0.0
        %921 = vmatprep.subr.mxu0 0.0
        %922 = vmatpush1.msra.mxu0 0.0
        %923 = vmatprep.subr.mxu0 0.0
        %924 = vmatpush1.msra.mxu0 0.0
        %925 = vmatprep.subr.mxu0 0.0
        %926 = vmatpush1.msra.mxu0 0.0
        %927 = vmatprep.subr.mxu0 0.0
        %928 = vmatpush1.msra.mxu0 0.0
        %929 = vmatprep.subr.mxu0 0.0
        %930 = vmatpush1.msra.mxu0 0.0
        %931 = vmatprep.subr.mxu0 0.0
        %932 = vmatpush1.msra.mxu0 0.0
        %933 = vmatprep.subr.mxu0 %v901
        %934 = vmatpush1.msra.mxu0 %v898
        %935 = vmatprep.subr.mxu0 0.0
        %936 = vmatpush2.msra.mxu0 0.0
        %937 = vmatprep.subr.mxu0 0.0
        %938 = vmatpush2.msra.mxu0 0.0
        %939 = vmatprep.subr.mxu0 0.0
        %940 = vmatpush2.msra.mxu0 0.0
        %941 = vmatprep.subr.mxu0 0.0
        %942 = vmatpush2.msra.mxu0 0.0
        %943 = vmatprep.subr.mxu0 0.0
        %944 = vmatpush2.msra.mxu0 0.0
        %945 = vmatprep.subr.mxu0 0.0
        %946 = vmatpush2.msra.mxu0 0.0
        %947 = vmatprep.subr.mxu0 0.0
        %948 = vmatpush2.msra.mxu0 0.0
        %949 = vmatprep.subr.mxu0 0.0
        %950 = vmatpush2.msra.mxu0 0.0
        %951 = vmatprep.subr.mxu0 0.0
        %952 = vmatpush2.msra.mxu0 0.0
        %953 = vmatprep.subr.mxu0 0.0
        %954 = vmatpush2.msra.mxu0 0.0
        %955 = vmatprep.subr.mxu0 0.0
        %956 = vmatpush2.msra.mxu0 0.0
        %957 = vmatprep.subr.mxu0 0.0
        %958 = vmatpush2.msra.mxu0 0.0
        %959 = vmatprep.subr.mxu0 0.0
        %960 = vmatpush2.msra.mxu0 0.0
        %961 = vmatprep.subr.mxu0 0.0
        %962 = vmatpush2.msra.mxu0 0.0
        %963 = vmatprep.subr.mxu0 0.0
        %964 = vmatpush2.msra.mxu0 0.0
        %965 = vmatprep.subr.mxu0 0.0
        %966 = vmatpush2.msra.mxu0 0.0
        %967 = vmatprep.mubr.f32.mxu0 0.0
        %968 = vmatmul.mubr.f32.gmra.mxu0 %v895
        %v969 = vpop.f32.mrf.mxu0
        %v970 = vadd.f32 0.0, %v969
        %v971 = vpop.f32.mrf.mxu0
        %v972 = vadd.f32 0.0, %v971
        %973 = vdwg.mxu0
        %v974 = vadd.f32 %v881, %v970
        %v975 = vadd.f32 %v882, %v972
        %976 = vrot.lane.b32.xlu0 %v223, 111
        %v977 = vpop.permute.xlu0 %976
        %978 = vrot.lane.b32.xlu0 %v230, 111
        %v979 = vpop.permute.xlu0 %978
        %vm980 = vcmp.lt.s32.totalorder %v225, 111
        %v981 = vsel %vm980, %v977, %v979
        %v982 = vsel %vm980, %v979, %v977
        %vm983 = vmand %vm793, %vm428
        %vm984 = vmand %vm794, %vm429
        %v985 = vsel %vm983, %v981, 0.0
        %v986 = vsel %vm984, %v982, 0.0
        %s987 = scalar_lea.vmem %s1, 64
        %v988 = vld [vmem:[%s987] sm:$0x3f]
        %v990 = vsel %vm259, %v988, 0
        %v993 = vsel %vm263, %v985, 0
        %v996 = vsel %vm263, %v986, 0
        %998 = vmatprep.subr.mxu0 0.0
        %999 = vmatpush1.msra.mxu0 0.0
        %1000 = vmatprep.subr.mxu0 0.0
        %1001 = vmatpush1.msra.mxu0 0.0
        %1002 = vmatprep.subr.mxu0 0.0
        %1003 = vmatpush1.msra.mxu0 0.0
        %1004 = vmatprep.subr.mxu0 0.0
        %1005 = vmatpush1.msra.mxu0 0.0
        %1006 = vmatprep.subr.mxu0 0.0
        %1007 = vmatpush1.msra.mxu0 0.0
        %1008 = vmatprep.subr.mxu0 0.0
        %1009 = vmatpush1.msra.mxu0 0.0
        %1010 = vmatprep.subr.mxu0 0.0
        %1011 = vmatpush1.msra.mxu0 0.0
        %1012 = vmatprep.subr.mxu0 0.0
        %1013 = vmatpush1.msra.mxu0 0.0
        %1014 = vmatprep.subr.mxu0 0.0
        %1015 = vmatpush1.msra.mxu0 0.0
        %1016 = vmatprep.subr.mxu0 0.0
        %1017 = vmatpush1.msra.mxu0 0.0
        %1018 = vmatprep.subr.mxu0 0.0
        %1019 = vmatpush1.msra.mxu0 0.0
        %1020 = vmatprep.subr.mxu0 0.0
        %1021 = vmatpush1.msra.mxu0 0.0
        %1022 = vmatprep.subr.mxu0 0.0
        %1023 = vmatpush1.msra.mxu0 0.0
        %1024 = vmatprep.subr.mxu0 0.0
        %1025 = vmatpush1.msra.mxu0 0.0
        %1026 = vmatprep.subr.mxu0 0.0
        %1027 = vmatpush1.msra.mxu0 0.0
        %1028 = vmatprep.subr.mxu0 %v996
        %1029 = vmatpush1.msra.mxu0 %v993
        %1030 = vmatprep.subr.mxu0 0.0
        %1031 = vmatpush2.msra.mxu0 0.0
        %1032 = vmatprep.subr.mxu0 0.0
        %1033 = vmatpush2.msra.mxu0 0.0
        %1034 = vmatprep.subr.mxu0 0.0
        %1035 = vmatpush2.msra.mxu0 0.0
        %1036 = vmatprep.subr.mxu0 0.0
        %1037 = vmatpush2.msra.mxu0 0.0
        %1038 = vmatprep.subr.mxu0 0.0
        %1039 = vmatpush2.msra.mxu0 0.0
        %1040 = vmatprep.subr.mxu0 0.0
        %1041 = vmatpush2.msra.mxu0 0.0
        %1042 = vmatprep.subr.mxu0 0.0
        %1043 = vmatpush2.msra.mxu0 0.0
        %1044 = vmatprep.subr.mxu0 0.0
        %1045 = vmatpush2.msra.mxu0 0.0
        %1046 = vmatprep.subr.mxu0 0.0
        %1047 = vmatpush2.msra.mxu0 0.0
        %1048 = vmatprep.subr.mxu0 0.0
        %1049 = vmatpush2.msra.mxu0 0.0
        %1050 = vmatprep.subr.mxu0 0.0
        %1051 = vmatpush2.msra.mxu0 0.0
        %1052 = vmatprep.subr.mxu0 0.0
        %1053 = vmatpush2.msra.mxu0 0.0
        %1054 = vmatprep.subr.mxu0 0.0
        %1055 = vmatpush2.msra.mxu0 0.0
        %1056 = vmatprep.subr.mxu0 0.0
        %1057 = vmatpush2.msra.mxu0 0.0
        %1058 = vmatprep.subr.mxu0 0.0
        %1059 = vmatpush2.msra.mxu0 0.0
        %1060 = vmatprep.subr.mxu0 0.0
        %1061 = vmatpush2.msra.mxu0 0.0
        %1062 = vmatprep.mubr.f32.mxu0 0.0
        %1063 = vmatmul.mubr.f32.gmra.mxu0 %v990
        %v1064 = vpop.f32.mrf.mxu0
        %v1065 = vadd.f32 0.0, %v1064
        %v1066 = vpop.f32.mrf.mxu0
        %v1067 = vadd.f32 0.0, %v1066
        %1068 = vdwg.mxu0
        %v1069 = vadd.f32 %v974, %v1065
        %v1070 = vadd.f32 %v975, %v1067
        %v1071 = vld [vmem:[%s2] sm:$0x3f]
        %1073 = vset.pattern.permute.xlu0 0
        %1074 = vperm.xlu0 %1073, %v1071
        %v1075 = vpop.permute.xlu0 %1074
        %v1077 = vadd.f32 %v1069, %v1075
        %v1078 = vadd.f32 %v1070, %v1075
        %v1081 = vrot.slane %v1077, 2
        %v1082 = vrot.slane %v1078, 2
        %1085 = vxpose.xlu0.b32.start [1/16] %v1081, 128
        %1086 = vxpose.xlu0.b32.cont [2/16] 0.0, 128
        %1087 = vxpose.xlu0.b32.cont [3/16] 0.0, 128
        %1088 = vxpose.xlu0.b32.cont [4/16] 0.0, 128
        %1089 = vxpose.xlu0.b32.cont [5/16] 0.0, 128
        %1090 = vxpose.xlu0.b32.cont [6/16] 0.0, 128
        %1091 = vxpose.xlu0.b32.cont [7/16] 0.0, 128
        %1092 = vxpose.xlu0.b32.cont [8/16] 0.0, 128
        %1093 = vxpose.xlu0.b32.cont [9/16] 0.0, 128
        %1094 = vxpose.xlu0.b32.cont [10/16] 0.0, 128
        %1095 = vxpose.xlu0.b32.cont [11/16] 0.0, 128
        %1096 = vxpose.xlu0.b32.cont [12/16] 0.0, 128
        %1097 = vxpose.xlu0.b32.cont [13/16] 0.0, 128
        %1098 = vxpose.xlu0.b32.cont [14/16] 0.0, 128
        %1099 = vxpose.xlu0.b32.cont [15/16] 0.0, 128
        %1100 = vxpose.xlu0.b32.end [16/16] 0.0, 128
        %v1101 = vpop.trf.xlu0
        %v1102 = vpop.trf.xlu0
        %v1103 = vpop.trf.xlu0
        %v1104 = vpop.trf.xlu0
        %v1105 = vpop.trf.xlu0
        %v1106 = vpop.trf.xlu0
        %v1107 = vpop.trf.xlu0
        %v1108 = vpop.trf.xlu0
        %v1109 = vpop.trf.xlu0
        %v1110 = vpop.trf.xlu0
        %v1111 = vpop.trf.xlu0
        %v1112 = vpop.trf.xlu0
        %v1113 = vpop.trf.xlu0
        %v1114 = vpop.trf.xlu0
        %v1115 = vpop.trf.xlu0
        %v1116 = vpop.trf.xlu0
        %1117 = vxpose.xlu0.b32.start [1/16] %v1082, 128
        %1118 = vxpose.xlu0.b32.cont [2/16] 0.0, 128
        %1119 = vxpose.xlu0.b32.cont [3/16] 0.0, 128
        %1120 = vxpose.xlu0.b32.cont [4/16] 0.0, 128
        %1121 = vxpose.xlu0.b32.cont [5/16] 0.0, 128
        %1122 = vxpose.xlu0.b32.cont [6/16] 0.0, 128
        %1123 = vxpose.xlu0.b32.cont [7/16] 0.0, 128
        %1124 = vxpose.xlu0.b32.cont [8/16] 0.0, 128
        %1125 = vxpose.xlu0.b32.cont [9/16] 0.0, 128
        %1126 = vxpose.xlu0.b32.cont [10/16] 0.0, 128
        %1127 = vxpose.xlu0.b32.cont [11/16] 0.0, 128
        %1128 = vxpose.xlu0.b32.cont [12/16] 0.0, 128
        %1129 = vxpose.xlu0.b32.cont [13/16] 0.0, 128
        %1130 = vxpose.xlu0.b32.cont [14/16] 0.0, 128
        %1131 = vxpose.xlu0.b32.cont [15/16] 0.0, 128
        %1132 = vxpose.xlu0.b32.end [16/16] 0.0, 128
        %v1133 = vpop.trf.xlu0
        %v1134 = vpop.trf.xlu0
        %v1135 = vpop.trf.xlu0
        %v1136 = vpop.trf.xlu0
        %v1137 = vpop.trf.xlu0
        %v1138 = vpop.trf.xlu0
        %v1139 = vpop.trf.xlu0
        %v1140 = vpop.trf.xlu0
        %v1141 = vpop.trf.xlu0
        %v1142 = vpop.trf.xlu0
        %v1143 = vpop.trf.xlu0
        %v1144 = vpop.trf.xlu0
        %v1145 = vpop.trf.xlu0
        %v1146 = vpop.trf.xlu0
        %v1147 = vpop.trf.xlu0
        %v1148 = vpop.trf.xlu0
        %vm1149 = vcmask 15360
        %v1151 = vsel %vm1149, %v1101, 0
        %v1154 = vsel %vm1149, %v1102, 0
        %v1157 = vsel %vm1149, %v1103, 0
        %v1160 = vsel %vm1149, %v1104, 0
        %v1163 = vsel %vm1149, %v1105, 0
        %v1166 = vsel %vm1149, %v1106, 0
        %v1169 = vsel %vm1149, %v1107, 0
        %v1172 = vsel %vm1149, %v1108, 0
        %v1175 = vsel %vm1149, %v1109, 0
        %v1178 = vsel %vm1149, %v1110, 0
        %v1181 = vsel %vm1149, %v1111, 0
        %v1184 = vsel %vm1149, %v1112, 0
        %v1187 = vsel %vm1149, %v1113, 0
        %v1190 = vsel %vm1149, %v1114, 0
        %v1193 = vsel %vm1149, %v1115, 0
        %v1196 = vsel %vm1149, %v1116, 0
        %v1199 = vsel %vm1149, %v1133, 0
        %v1202 = vsel %vm1149, %v1134, 0
        %v1205 = vsel %vm1149, %v1135, 0
        %v1208 = vsel %vm1149, %v1136, 0
        %v1211 = vsel %vm1149, %v1137, 0
        %v1214 = vsel %vm1149, %v1138, 0
        %v1217 = vsel %vm1149, %v1139, 0
        %v1220 = vsel %vm1149, %v1140, 0
        %v1223 = vsel %vm1149, %v1141, 0
        %v1226 = vsel %vm1149, %v1142, 0
        %v1229 = vsel %vm1149, %v1143, 0
        %v1232 = vsel %vm1149, %v1144, 0
        %v1235 = vsel %vm1149, %v1145, 0
        %v1238 = vsel %vm1149, %v1146, 0
        %v1241 = vsel %vm1149, %v1147, 0
        %v1244 = vsel %vm1149, %v1148, 0
        %vm1246 = vcmask 1041408
        %v1247 = vsel %vm1246, %v1077, 0
        %v1249 = vsel %vm1246, %v1078, 0
        %1251 = vmatprep.subr.mxu0 0.0
        %1252 = vmatpush1.msra.mxu0 0.0
        %1253 = vmatprep.subr.mxu0 0.0
        %1254 = vmatpush1.msra.mxu0 0.0
        %1255 = vmatprep.subr.mxu0 0.0
        %1256 = vmatpush1.msra.mxu0 0.0
        %1257 = vmatprep.subr.mxu0 0.0
        %1258 = vmatpush1.msra.mxu0 0.0
        %1259 = vmatprep.subr.mxu0 0.0
        %1260 = vmatpush1.msra.mxu0 0.0
        %1261 = vmatprep.subr.mxu0 0.0
        %1262 = vmatpush1.msra.mxu0 0.0
        %1263 = vmatprep.subr.mxu0 0.0
        %1264 = vmatpush1.msra.mxu0 0.0
        %1265 = vmatprep.subr.mxu0 0.0
        %1266 = vmatpush1.msra.mxu0 0.0
        %1267 = vmatprep.subr.mxu0 0.0
        %1268 = vmatpush1.msra.mxu0 0.0
        %1269 = vmatprep.subr.mxu0 0.0
        %1270 = vmatpush1.msra.mxu0 0.0
        %1271 = vmatprep.subr.mxu0 0.0
        %1272 = vmatpush1.msra.mxu0 0.0
        %1273 = vmatprep.subr.mxu0 0.0
        %1274 = vmatpush1.msra.mxu0 0.0
        %1275 = vmatprep.subr.mxu0 0.0
        %1276 = vmatpush1.msra.mxu0 0.0
        %1277 = vmatprep.subr.mxu0 0.0
        %1278 = vmatpush1.msra.mxu0 0.0
        %1279 = vmatprep.subr.mxu0 0.0
        %1280 = vmatpush1.msra.mxu0 0.0
        %1281 = vmatprep.subr.mxu0 %v1249
        %1282 = vmatpush1.msra.mxu0 %v1247
        %1283 = vmatprep.subr.mxu0 0.0
        %1284 = vmatpush2.msra.mxu0 0.0
        %1285 = vmatprep.subr.mxu0 0.0
        %1286 = vmatpush2.msra.mxu0 0.0
        %1287 = vmatprep.subr.mxu0 0.0
        %1288 = vmatpush2.msra.mxu0 0.0
        %1289 = vmatprep.subr.mxu0 0.0
        %1290 = vmatpush2.msra.mxu0 0.0
        %1291 = vmatprep.subr.mxu0 0.0
        %1292 = vmatpush2.msra.mxu0 0.0
        %1293 = vmatprep.subr.mxu0 0.0
        %1294 = vmatpush2.msra.mxu0 0.0
        %1295 = vmatprep.subr.mxu0 0.0
        %1296 = vmatpush2.msra.mxu0 0.0
        %1297 = vmatprep.subr.mxu0 0.0
        %1298 = vmatpush2.msra.mxu0 0.0
        %1299 = vmatprep.subr.mxu0 0.0
        %1300 = vmatpush2.msra.mxu0 0.0
        %1301 = vmatprep.subr.mxu0 0.0
        %1302 = vmatpush2.msra.mxu0 0.0
        %1303 = vmatprep.subr.mxu0 0.0
        %1304 = vmatpush2.msra.mxu0 0.0
        %1305 = vmatprep.subr.mxu0 0.0
        %1306 = vmatpush2.msra.mxu0 0.0
        %1307 = vmatprep.subr.mxu0 0.0
        %1308 = vmatpush2.msra.mxu0 0.0
        %1309 = vmatprep.subr.mxu0 0.0
        %1310 = vmatpush2.msra.mxu0 0.0
        %1311 = vmatprep.subr.mxu0 0.0
        %1312 = vmatpush2.msra.mxu0 0.0
        %1313 = vmatprep.subr.mxu0 0.0
        %1314 = vmatpush2.msra.mxu0 0.0
        %1315 = vmatprep.mubr.f32.mxu0 0.0
        %1316 = vmatmul.mubr.f32.gmra.mxu0 %v1151
        %v1317 = vpop.f32.mrf.mxu0
        %v1318 = vadd.f32 0.0, %v1317
        %v1319 = vpop.f32.mrf.mxu0
        %v1320 = vadd.f32 0.0, %v1319
        %1321 = vmatprep.mubr.f32.mxu0 0.0
        %1322 = vmatmul.mubr.f32.gmra.mxu0 %v1154
        %v1323 = vpop.f32.mrf.mxu0
        %v1324 = vadd.f32 0.0, %v1323
        %v1325 = vpop.f32.mrf.mxu0
        %v1326 = vadd.f32 0.0, %v1325
        %1327 = vmatprep.mubr.f32.mxu0 0.0
        %1328 = vmatmul.mubr.f32.gmra.mxu0 %v1157
        %v1329 = vpop.f32.mrf.mxu0
        %v1330 = vadd.f32 0.0, %v1329
        %v1331 = vpop.f32.mrf.mxu0
        %v1332 = vadd.f32 0.0, %v1331
        %1333 = vmatprep.mubr.f32.mxu0 0.0
        %1334 = vmatmul.mubr.f32.gmra.mxu0 %v1160
        %v1335 = vpop.f32.mrf.mxu0
        %v1336 = vadd.f32 0.0, %v1335
        %v1337 = vpop.f32.mrf.mxu0
        %v1338 = vadd.f32 0.0, %v1337
        %1339 = vmatprep.mubr.f32.mxu0 0.0
        %1340 = vmatmul.mubr.f32.gmra.mxu0 %v1163
        %v1341 = vpop.f32.mrf.mxu0
        %v1342 = vadd.f32 0.0, %v1341
        %v1343 = vpop.f32.mrf.mxu0
        %v1344 = vadd.f32 0.0, %v1343
        %1345 = vmatprep.mubr.f32.mxu0 0.0
        %1346 = vmatmul.mubr.f32.gmra.mxu0 %v1166
        %v1347 = vpop.f32.mrf.mxu0
        %v1348 = vadd.f32 0.0, %v1347
        %v1349 = vpop.f32.mrf.mxu0
        %v1350 = vadd.f32 0.0, %v1349
        %1351 = vmatprep.mubr.f32.mxu0 0.0
        %1352 = vmatmul.mubr.f32.gmra.mxu0 %v1169
        %v1353 = vpop.f32.mrf.mxu0
        %v1354 = vadd.f32 0.0, %v1353
        %v1355 = vpop.f32.mrf.mxu0
        %v1356 = vadd.f32 0.0, %v1355
        %1357 = vmatprep.mubr.f32.mxu0 0.0
        %1358 = vmatmul.mubr.f32.gmra.mxu0 %v1172
        %v1359 = vpop.f32.mrf.mxu0
        %v1360 = vadd.f32 0.0, %v1359
        %v1361 = vpop.f32.mrf.mxu0
        %v1362 = vadd.f32 0.0, %v1361
        %1363 = vmatprep.mubr.f32.mxu0 0.0
        %1364 = vmatmul.mubr.f32.gmra.mxu0 %v1175
        %v1365 = vpop.f32.mrf.mxu0
        %v1366 = vadd.f32 0.0, %v1365
        %v1367 = vpop.f32.mrf.mxu0
        %v1368 = vadd.f32 0.0, %v1367
        %1369 = vmatprep.mubr.f32.mxu0 0.0
        %1370 = vmatmul.mubr.f32.gmra.mxu0 %v1178
        %v1371 = vpop.f32.mrf.mxu0
        %v1372 = vadd.f32 0.0, %v1371
        %v1373 = vpop.f32.mrf.mxu0
        %v1374 = vadd.f32 0.0, %v1373
        %1375 = vmatprep.mubr.f32.mxu0 0.0
        %1376 = vmatmul.mubr.f32.gmra.mxu0 %v1181
        %v1377 = vpop.f32.mrf.mxu0
        %v1378 = vadd.f32 0.0, %v1377
        %v1379 = vpop.f32.mrf.mxu0
        %v1380 = vadd.f32 0.0, %v1379
        %1381 = vmatprep.mubr.f32.mxu0 0.0
        %1382 = vmatmul.mubr.f32.gmra.mxu0 %v1184
        %v1383 = vpop.f32.mrf.mxu0
        %v1384 = vadd.f32 0.0, %v1383
        %v1385 = vpop.f32.mrf.mxu0
        %v1386 = vadd.f32 0.0, %v1385
        %1387 = vmatprep.mubr.f32.mxu0 0.0
        %1388 = vmatmul.mubr.f32.gmra.mxu0 %v1187
        %v1389 = vpop.f32.mrf.mxu0
        %v1390 = vadd.f32 0.0, %v1389
        %v1391 = vpop.f32.mrf.mxu0
        %v1392 = vadd.f32 0.0, %v1391
        %1393 = vmatprep.mubr.f32.mxu0 0.0
        %1394 = vmatmul.mubr.f32.gmra.mxu0 %v1190
        %v1395 = vpop.f32.mrf.mxu0
        %v1396 = vadd.f32 0.0, %v1395
        %v1397 = vpop.f32.mrf.mxu0
        %v1398 = vadd.f32 0.0, %v1397
        %1399 = vmatprep.mubr.f32.mxu0 0.0
        %1400 = vmatmul.mubr.f32.gmra.mxu0 %v1193
        %v1401 = vpop.f32.mrf.mxu0
        %v1402 = vadd.f32 0.0, %v1401
        %v1403 = vpop.f32.mrf.mxu0
        %v1404 = vadd.f32 0.0, %v1403
        %1405 = vmatprep.mubr.f32.mxu0 0.0
        %1406 = vmatmul.mubr.f32.gmra.mxu0 %v1196
        %v1407 = vpop.f32.mrf.mxu0
        %v1408 = vadd.f32 0.0, %v1407
        %v1409 = vpop.f32.mrf.mxu0
        %v1410 = vadd.f32 0.0, %v1409
        %1411 = vmatprep.mubr.f32.mxu0 0.0
        %1412 = vmatmul.mubr.f32.gmra.mxu0 %v1199
        %v1413 = vpop.f32.mrf.mxu0
        %v1414 = vadd.f32 0.0, %v1413
        %v1415 = vpop.f32.mrf.mxu0
        %v1416 = vadd.f32 0.0, %v1415
        %1417 = vmatprep.mubr.f32.mxu0 0.0
        %1418 = vmatmul.mubr.f32.gmra.mxu0 %v1202
        %v1419 = vpop.f32.mrf.mxu0
        %v1420 = vadd.f32 0.0, %v1419
        %v1421 = vpop.f32.mrf.mxu0
        %v1422 = vadd.f32 0.0, %v1421
        %1423 = vmatprep.mubr.f32.mxu0 0.0
        %1424 = vmatmul.mubr.f32.gmra.mxu0 %v1205
        %v1425 = vpop.f32.mrf.mxu0
        %v1426 = vadd.f32 0.0, %v1425
        %v1427 = vpop.f32.mrf.mxu0
        %v1428 = vadd.f32 0.0, %v1427
        %1429 = vmatprep.mubr.f32.mxu0 0.0
        %1430 = vmatmul.mubr.f32.gmra.mxu0 %v1208
        %v1431 = vpop.f32.mrf.mxu0
        %v1432 = vadd.f32 0.0, %v1431
        %v1433 = vpop.f32.mrf.mxu0
        %v1434 = vadd.f32 0.0, %v1433
        %1435 = vmatprep.mubr.f32.mxu0 0.0
        %1436 = vmatmul.mubr.f32.gmra.mxu0 %v1211
        %v1437 = vpop.f32.mrf.mxu0
        %v1438 = vadd.f32 0.0, %v1437
        %v1439 = vpop.f32.mrf.mxu0
        %v1440 = vadd.f32 0.0, %v1439
        %1441 = vmatprep.mubr.f32.mxu0 0.0
        %1442 = vmatmul.mubr.f32.gmra.mxu0 %v1214
        %v1443 = vpop.f32.mrf.mxu0
        %v1444 = vadd.f32 0.0, %v1443
        %v1445 = vpop.f32.mrf.mxu0
        %v1446 = vadd.f32 0.0, %v1445
        %1447 = vmatprep.mubr.f32.mxu0 0.0
        %1448 = vmatmul.mubr.f32.gmra.mxu0 %v1217
        %v1449 = vpop.f32.mrf.mxu0
        %v1450 = vadd.f32 0.0, %v1449
        %v1451 = vpop.f32.mrf.mxu0
        %v1452 = vadd.f32 0.0, %v1451
        %1453 = vmatprep.mubr.f32.mxu0 0.0
        %1454 = vmatmul.mubr.f32.gmra.mxu0 %v1220
        %v1455 = vpop.f32.mrf.mxu0
        %v1456 = vadd.f32 0.0, %v1455
        %v1457 = vpop.f32.mrf.mxu0
        %v1458 = vadd.f32 0.0, %v1457
        %1459 = vmatprep.mubr.f32.mxu0 0.0
        %1460 = vmatmul.mubr.f32.gmra.mxu0 %v1223
        %v1461 = vpop.f32.mrf.mxu0
        %v1462 = vadd.f32 0.0, %v1461
        %v1463 = vpop.f32.mrf.mxu0
        %v1464 = vadd.f32 0.0, %v1463
        %1465 = vmatprep.mubr.f32.mxu0 0.0
        %1466 = vmatmul.mubr.f32.gmra.mxu0 %v1226
        %v1467 = vpop.f32.mrf.mxu0
        %v1468 = vadd.f32 0.0, %v1467
        %v1469 = vpop.f32.mrf.mxu0
        %v1470 = vadd.f32 0.0, %v1469
        %1471 = vmatprep.mubr.f32.mxu0 0.0
        %1472 = vmatmul.mubr.f32.gmra.mxu0 %v1229
        %v1473 = vpop.f32.mrf.mxu0
        %v1474 = vadd.f32 0.0, %v1473
        %v1475 = vpop.f32.mrf.mxu0
        %v1476 = vadd.f32 0.0, %v1475
        %1477 = vmatprep.mubr.f32.mxu0 0.0
        %1478 = vmatmul.mubr.f32.gmra.mxu0 %v1232
        %v1479 = vpop.f32.mrf.mxu0
        %v1480 = vadd.f32 0.0, %v1479
        %v1481 = vpop.f32.mrf.mxu0
        %v1482 = vadd.f32 0.0, %v1481
        %1483 = vmatprep.mubr.f32.mxu0 0.0
        %1484 = vmatmul.mubr.f32.gmra.mxu0 %v1235
        %v1485 = vpop.f32.mrf.mxu0
        %v1486 = vadd.f32 0.0, %v1485
        %v1487 = vpop.f32.mrf.mxu0
        %v1488 = vadd.f32 0.0, %v1487
        %1489 = vmatprep.mubr.f32.mxu0 0.0
        %1490 = vmatmul.mubr.f32.gmra.mxu0 %v1238
        %v1491 = vpop.f32.mrf.mxu0
        %v1492 = vadd.f32 0.0, %v1491
        %v1493 = vpop.f32.mrf.mxu0
        %v1494 = vadd.f32 0.0, %v1493
        %1495 = vmatprep.mubr.f32.mxu0 0.0
        %1496 = vmatmul.mubr.f32.gmra.mxu0 %v1241
        %v1497 = vpop.f32.mrf.mxu0
        %v1498 = vadd.f32 0.0, %v1497
        %v1499 = vpop.f32.mrf.mxu0
        %v1500 = vadd.f32 0.0, %v1499
        %1501 = vmatprep.mubr.f32.mxu0 0.0
        %1502 = vmatmul.mubr.f32.gmra.mxu0 %v1244
        %v1503 = vpop.f32.mrf.mxu0
        %v1504 = vadd.f32 0.0, %v1503
        %v1505 = vpop.f32.mrf.mxu0
        %v1506 = vadd.f32 0.0, %v1505
        %1507 = vdwg.mxu0
        %v1508 = vmax.f32 %v1318, %v1330
        %v1509 = vmax.f32 %v1324, %v1336
        %v1510 = vmax.f32 %v1508, %v1342
        %v1511 = vmax.f32 %v1509, %v1348
        %v1512 = vmax.f32 %v1510, %v1354
        %v1513 = vmax.f32 %v1511, %v1360
        %v1514 = vmax.f32 %v1512, %v1366
        %v1515 = vmax.f32 %v1513, %v1372
        %v1516 = vmax.f32 %v1514, %v1378
        %v1517 = vmax.f32 %v1515, %v1384
        %v1518 = vmax.f32 %v1516, %v1390
        %v1519 = vmax.f32 %v1517, %v1396
        %v1520 = vmax.f32 %v1518, %v1402
        %v1521 = vmax.f32 %v1519, %v1408
        %v1522 = vmax.f32 %v1520, %v1414
        %v1523 = vmax.f32 %v1521, %v1420
        %v1524 = vmax.f32 %v1522, %v1426
        %v1525 = vmax.f32 %v1523, %v1432
        %v1526 = vmax.f32 %v1524, %v1438
        %v1527 = vmax.f32 %v1525, %v1444
        %v1528 = vmax.f32 %v1526, %v1450
        %v1529 = vmax.f32 %v1527, %v1456
        %v1530 = vmax.f32 %v1528, %v1462
        %v1531 = vmax.f32 %v1529, %v1468
        %v1532 = vmax.f32 %v1530, %v1474
        %v1533 = vmax.f32 %v1531, %v1480
        %v1534 = vmax.f32 %v1532, %v1486
        %v1535 = vmax.f32 %v1533, %v1492
        %v1536 = vmax.f32 %v1534, %v1498
        %v1537 = vmax.f32 %v1535, %v1504
        %v1538 = vmax.f32 %v1536, %v1537
        %v1539 = vrot.slane %v1538, 4
        %v1540 = vmax.f32 %v1538, %v1539
        %v1541 = vrot.slane %v1540, 2
        %v1542 = vmax.f32 %v1540, %v1541
        %v1543 = vrot.slane %v1542, 1
        %v1544 = vmax.f32 %v1542, %v1543
        %v1545 = vmax.f32 %v1320, %v1332
        %v1546 = vmax.f32 %v1326, %v1338
        %v1547 = vmax.f32 %v1545, %v1344
        %v1548 = vmax.f32 %v1546, %v1350
        %v1549 = vmax.f32 %v1547, %v1356
        %v1550 = vmax.f32 %v1548, %v1362
        %v1551 = vmax.f32 %v1549, %v1368
        %v1552 = vmax.f32 %v1550, %v1374
        %v1553 = vmax.f32 %v1551, %v1380
        %v1554 = vmax.f32 %v1552, %v1386
        %v1555 = vmax.f32 %v1553, %v1392
        %v1556 = vmax.f32 %v1554, %v1398
        %v1557 = vmax.f32 %v1555, %v1404
        %v1558 = vmax.f32 %v1556, %v1410
        %v1559 = vmax.f32 %v1557, %v1416
        %v1560 = vmax.f32 %v1558, %v1422
        %v1561 = vmax.f32 %v1559, %v1428
        %v1562 = vmax.f32 %v1560, %v1434
        %v1563 = vmax.f32 %v1561, %v1440
        %v1564 = vmax.f32 %v1562, %v1446
        %v1565 = vmax.f32 %v1563, %v1452
        %v1566 = vmax.f32 %v1564, %v1458
        %v1567 = vmax.f32 %v1565, %v1464
        %v1568 = vmax.f32 %v1566, %v1470
        %v1569 = vmax.f32 %v1567, %v1476
        %v1570 = vmax.f32 %v1568, %v1482
        %v1571 = vmax.f32 %v1569, %v1488
        %v1572 = vmax.f32 %v1570, %v1494
        %v1573 = vmax.f32 %v1571, %v1500
        %v1574 = vmax.f32 %v1572, %v1506
        %v1575 = vmax.f32 %v1573, %v1574
        %v1576 = vrot.slane %v1575, 4
        %v1577 = vmax.f32 %v1575, %v1576
        %v1578 = vrot.slane %v1577, 2
        %v1579 = vmax.f32 %v1577, %v1578
        %v1580 = vrot.slane %v1579, 1
        %v1581 = vmax.f32 %v1579, %v1580
        %v1582 = vsub.f32 %v1318, %v1544
        %v1583 = vsub.f32 %v1320, %v1581
        %v1584 = vsub.f32 %v1324, %v1544
        %v1585 = vsub.f32 %v1326, %v1581
        %v1586 = vsub.f32 %v1330, %v1544
        %v1587 = vsub.f32 %v1332, %v1581
        %v1588 = vsub.f32 %v1336, %v1544
        %v1589 = vsub.f32 %v1338, %v1581
        %v1590 = vsub.f32 %v1342, %v1544
        %v1591 = vsub.f32 %v1344, %v1581
        %v1592 = vsub.f32 %v1348, %v1544
        %v1593 = vsub.f32 %v1350, %v1581
        %v1594 = vsub.f32 %v1354, %v1544
        %v1595 = vsub.f32 %v1356, %v1581
        %v1596 = vsub.f32 %v1360, %v1544
        %v1597 = vsub.f32 %v1362, %v1581
        %v1598 = vsub.f32 %v1366, %v1544
        %v1599 = vsub.f32 %v1368, %v1581
        %v1600 = vsub.f32 %v1372, %v1544
        %v1601 = vsub.f32 %v1374, %v1581
        %v1602 = vsub.f32 %v1378, %v1544
        %v1603 = vsub.f32 %v1380, %v1581
        %v1604 = vsub.f32 %v1384, %v1544
        %v1605 = vsub.f32 %v1386, %v1581
        %v1606 = vsub.f32 %v1390, %v1544
        %v1607 = vsub.f32 %v1392, %v1581
        %v1608 = vsub.f32 %v1396, %v1544
        %v1609 = vsub.f32 %v1398, %v1581
        %v1610 = vsub.f32 %v1402, %v1544
        %v1611 = vsub.f32 %v1404, %v1581
        %v1612 = vsub.f32 %v1408, %v1544
        %v1613 = vsub.f32 %v1410, %v1581
        %v1614 = vsub.f32 %v1414, %v1544
        %v1615 = vsub.f32 %v1416, %v1581
        %v1616 = vsub.f32 %v1420, %v1544
        %v1617 = vsub.f32 %v1422, %v1581
        %v1618 = vsub.f32 %v1426, %v1544
        %v1619 = vsub.f32 %v1428, %v1581
        %v1620 = vsub.f32 %v1432, %v1544
        %v1621 = vsub.f32 %v1434, %v1581
        %v1622 = vsub.f32 %v1438, %v1544
        %v1623 = vsub.f32 %v1440, %v1581
        %v1624 = vsub.f32 %v1444, %v1544
        %v1625 = vsub.f32 %v1446, %v1581
        %v1626 = vsub.f32 %v1450, %v1544
        %v1627 = vsub.f32 %v1452, %v1581
        %v1628 = vsub.f32 %v1456, %v1544
        %v1629 = vsub.f32 %v1458, %v1581
        %v1630 = vsub.f32 %v1462, %v1544
        %v1631 = vsub.f32 %v1464, %v1581
        %v1632 = vsub.f32 %v1468, %v1544
        %v1633 = vsub.f32 %v1470, %v1581
        %v1634 = vsub.f32 %v1474, %v1544
        %v1635 = vsub.f32 %v1476, %v1581
        %v1636 = vsub.f32 %v1480, %v1544
        %v1637 = vsub.f32 %v1482, %v1581
        %v1638 = vsub.f32 %v1486, %v1544
        %v1639 = vsub.f32 %v1488, %v1581
        %v1640 = vsub.f32 %v1492, %v1544
        %v1641 = vsub.f32 %v1494, %v1581
        %v1642 = vsub.f32 %v1498, %v1544
        %v1643 = vsub.f32 %v1500, %v1581
        %v1644 = vsub.f32 %v1504, %v1544
        %v1645 = vsub.f32 %v1506, %v1581
        %v1646 = vmul.f32 %v1582, 1.442695
        %v1647 = vpow.pop %v1646
        %v1648 = vmul.f32 %v1583, 1.442695
        %v1649 = vpow.pop %v1648
        %v1650 = vmul.f32 %v1584, 1.442695
        %v1651 = vpow.pop %v1650
        %v1652 = vmul.f32 %v1585, 1.442695
        %v1653 = vpow.pop %v1652
        %v1654 = vmul.f32 %v1586, 1.442695
        %v1655 = vpow.pop %v1654
        %v1656 = vmul.f32 %v1587, 1.442695
        %v1657 = vpow.pop %v1656
        %v1658 = vmul.f32 %v1588, 1.442695
        %v1659 = vpow.pop %v1658
        %v1660 = vmul.f32 %v1589, 1.442695
        %v1661 = vpow.pop %v1660
        %v1662 = vmul.f32 %v1590, 1.442695
        %v1663 = vpow.pop %v1662
        %v1664 = vmul.f32 %v1591, 1.442695
        %v1665 = vpow.pop %v1664
        %v1666 = vmul.f32 %v1592, 1.442695
        %v1667 = vpow.pop %v1666
        %v1668 = vmul.f32 %v1593, 1.442695
        %v1669 = vpow.pop %v1668
        %v1670 = vmul.f32 %v1594, 1.442695
        %v1671 = vpow.pop %v1670
        %v1672 = vmul.f32 %v1595, 1.442695
        %v1673 = vpow.pop %v1672
        %v1674 = vmul.f32 %v1596, 1.442695
        %v1675 = vpow.pop %v1674
        %v1676 = vmul.f32 %v1597, 1.442695
        %v1677 = vpow.pop %v1676
        %v1678 = vmul.f32 %v1598, 1.442695
        %v1679 = vpow.pop %v1678
        %v1680 = vmul.f32 %v1599, 1.442695
        %v1681 = vpow.pop %v1680
        %v1682 = vmul.f32 %v1600, 1.442695
        %v1683 = vpow.pop %v1682
        %v1684 = vmul.f32 %v1601, 1.442695
        %v1685 = vpow.pop %v1684
        %v1686 = vmul.f32 %v1602, 1.442695
        %v1687 = vpow.pop %v1686
        %v1688 = vmul.f32 %v1603, 1.442695
        %v1689 = vpow.pop %v1688
        %v1690 = vmul.f32 %v1604, 1.442695
        %v1691 = vpow.pop %v1690
        %v1692 = vmul.f32 %v1605, 1.442695
        %v1693 = vpow.pop %v1692
        %v1694 = vmul.f32 %v1606, 1.442695
        %v1695 = vpow.pop %v1694
        %v1696 = vmul.f32 %v1607, 1.442695
        %v1697 = vpow.pop %v1696
        %v1698 = vmul.f32 %v1608, 1.442695
        %v1699 = vpow.pop %v1698
        %v1700 = vmul.f32 %v1609, 1.442695
        %v1701 = vpow.pop %v1700
        %v1702 = vmul.f32 %v1610, 1.442695
        %v1703 = vpow.pop %v1702
        %v1704 = vmul.f32 %v1611, 1.442695
        %v1705 = vpow.pop %v1704
        %v1706 = vmul.f32 %v1612, 1.442695
        %v1707 = vpow.pop %v1706
        %v1708 = vmul.f32 %v1613, 1.442695
        %v1709 = vpow.pop %v1708
        %v1710 = vmul.f32 %v1614, 1.442695
        %v1711 = vpow.pop %v1710
        %v1712 = vmul.f32 %v1615, 1.442695
        %v1713 = vpow.pop %v1712
        %v1714 = vmul.f32 %v1616, 1.442695
        %v1715 = vpow.pop %v1714
        %v1716 = vmul.f32 %v1617, 1.442695
        %v1717 = vpow.pop %v1716
        %v1718 = vmul.f32 %v1618, 1.442695
        %v1719 = vpow.pop %v1718
        %v1720 = vmul.f32 %v1619, 1.442695
        %v1721 = vpow.pop %v1720
        %v1722 = vmul.f32 %v1620, 1.442695
        %v1723 = vpow.pop %v1722
        %v1724 = vmul.f32 %v1621, 1.442695
        %v1725 = vpow.pop %v1724
        %v1726 = vmul.f32 %v1622, 1.442695
        %v1727 = vpow.pop %v1726
        %v1728 = vmul.f32 %v1623, 1.442695
        %v1729 = vpow.pop %v1728
        %v1730 = vmul.f32 %v1624, 1.442695
        %v1731 = vpow.pop %v1730
        %v1732 = vmul.f32 %v1625, 1.442695
        %v1733 = vpow.pop %v1732
        %v1734 = vmul.f32 %v1626, 1.442695
        %v1735 = vpow.pop %v1734
        %v1736 = vmul.f32 %v1627, 1.442695
        %v1737 = vpow.pop %v1736
        %v1738 = vmul.f32 %v1628, 1.442695
        %v1739 = vpow.pop %v1738
        %v1740 = vmul.f32 %v1629, 1.442695
        %v1741 = vpow.pop %v1740
        %v1742 = vmul.f32 %v1630, 1.442695
        %v1743 = vpow.pop %v1742
        %v1744 = vmul.f32 %v1631, 1.442695
        %v1745 = vpow.pop %v1744
        %v1746 = vmul.f32 %v1632, 1.442695
        %v1747 = vpow.pop %v1746
        %v1748 = vmul.f32 %v1633, 1.442695
        %v1749 = vpow.pop %v1748
        %v1750 = vmul.f32 %v1634, 1.442695
        %v1751 = vpow.pop %v1750
        %v1752 = vmul.f32 %v1635, 1.442695
        %v1753 = vpow.pop %v1752
        %v1754 = vmul.f32 %v1636, 1.442695
        %v1755 = vpow.pop %v1754
        %v1756 = vmul.f32 %v1637, 1.442695
        %v1757 = vpow.pop %v1756
        %v1758 = vmul.f32 %v1638, 1.442695
        %v1759 = vpow.pop %v1758
        %v1760 = vmul.f32 %v1639, 1.442695
        %v1761 = vpow.pop %v1760
        %v1762 = vmul.f32 %v1640, 1.442695
        %v1763 = vpow.pop %v1762
        %v1764 = vmul.f32 %v1641, 1.442695
        %v1765 = vpow.pop %v1764
        %v1766 = vmul.f32 %v1642, 1.442695
        %v1767 = vpow.pop %v1766
        %v1768 = vmul.f32 %v1643, 1.442695
        %v1769 = vpow.pop %v1768
        %v1770 = vmul.f32 %v1644, 1.442695
        %v1771 = vpow.pop %v1770
        %v1772 = vmul.f32 %v1645, 1.442695
        %v1773 = vpow.pop %v1772
        %v1774 = vadd.f32 %v1647, %v1651
        %v1775 = vadd.f32 %v1774, %v1655
        %v1776 = vadd.f32 %v1775, %v1659
        %v1777 = vadd.f32 %v1776, %v1663
        %v1778 = vadd.f32 %v1777, %v1667
        %v1779 = vadd.f32 %v1778, %v1671
        %v1780 = vadd.f32 %v1779, %v1675
        %v1781 = vadd.f32 %v1780, %v1679
        %v1782 = vadd.f32 %v1781, %v1683
        %v1783 = vadd.f32 %v1782, %v1687
        %v1784 = vadd.f32 %v1783, %v1691
        %v1785 = vadd.f32 %v1784, %v1695
        %v1786 = vadd.f32 %v1785, %v1699
        %v1787 = vadd.f32 %v1786, %v1703
        %v1788 = vadd.f32 %v1787, %v1707
        %v1789 = vadd.f32 %v1788, %v1711
        %v1790 = vadd.f32 %v1789, %v1715
        %v1791 = vadd.f32 %v1790, %v1719
        %v1792 = vadd.f32 %v1791, %v1723
        %v1793 = vadd.f32 %v1792, %v1727
        %v1794 = vadd.f32 %v1793, %v1731
        %v1795 = vadd.f32 %v1794, %v1735
        %v1796 = vadd.f32 %v1795, %v1739
        %v1797 = vadd.f32 %v1796, %v1743
        %v1798 = vadd.f32 %v1797, %v1747
        %v1799 = vadd.f32 %v1798, %v1751
        %v1800 = vadd.f32 %v1799, %v1755
        %v1801 = vadd.f32 %v1800, %v1759
        %v1802 = vadd.f32 %v1801, %v1763
        %v1803 = vadd.f32 %v1802, %v1767
        %v1804 = vadd.f32 %v1803, %v1771
        %v1805 = vrot.slane %v1804, 4
        %v1806 = vadd.f32 %v1804, %v1805
        %v1807 = vrot.slane %v1806, 2
        %v1808 = vadd.f32 %v1806, %v1807
        %v1809 = vrot.slane %v1808, 1
        %v1810 = vadd.f32 %v1808, %v1809
        %v1811 = vadd.f32 %v1649, %v1653
        %v1812 = vadd.f32 %v1811, %v1657
        %v1813 = vadd.f32 %v1812, %v1661
        %v1814 = vadd.f32 %v1813, %v1665
        %v1815 = vadd.f32 %v1814, %v1669
        %v1816 = vadd.f32 %v1815, %v1673
        %v1817 = vadd.f32 %v1816, %v1677
        %v1818 = vadd.f32 %v1817, %v1681
        %v1819 = vadd.f32 %v1818, %v1685
        %v1820 = vadd.f32 %v1819, %v1689
        %v1821 = vadd.f32 %v1820, %v1693
        %v1822 = vadd.f32 %v1821, %v1697
        %v1823 = vadd.f32 %v1822, %v1701
        %v1824 = vadd.f32 %v1823, %v1705
        %v1825 = vadd.f32 %v1824, %v1709
        %v1826 = vadd.f32 %v1825, %v1713
        %v1827 = vadd.f32 %v1826, %v1717
        %v1828 = vadd.f32 %v1827, %v1721
        %v1829 = vadd.f32 %v1828, %v1725
        %v1830 = vadd.f32 %v1829, %v1729
        %v1831 = vadd.f32 %v1830, %v1733
        %v1832 = vadd.f32 %v1831, %v1737
        %v1833 = vadd.f32 %v1832, %v1741
        %v1834 = vadd.f32 %v1833, %v1745
        %v1835 = vadd.f32 %v1834, %v1749
        %v1836 = vadd.f32 %v1835, %v1753
        %v1837 = vadd.f32 %v1836, %v1757
        %v1838 = vadd.f32 %v1837, %v1761
        %v1839 = vadd.f32 %v1838, %v1765
        %v1840 = vadd.f32 %v1839, %v1769
        %v1841 = vadd.f32 %v1840, %v1773
        %v1842 = vrot.slane %v1841, 4
        %v1843 = vadd.f32 %v1841, %v1842
        %v1844 = vrot.slane %v1843, 2
        %v1845 = vadd.f32 %v1843, %v1844
        %v1846 = vrot.slane %v1845, 1
        %v1847 = vadd.f32 %v1845, %v1846
        %v1848 = vrot.slane %v1077, 4
        %v1849 = vrot.slane %v1078, 4
        %1852 = vmatprep.subr.mxu0 %v1709
        %1853 = vmatpush1.msra.mxu0 %v1707
        %1854 = vmatprep.subr.mxu0 %v1705
        %1855 = vmatpush1.msra.mxu0 %v1703
        %1856 = vmatprep.subr.mxu0 %v1701
        %1857 = vmatpush1.msra.mxu0 %v1699
        %1858 = vmatprep.subr.mxu0 %v1697
        %1859 = vmatpush1.msra.mxu0 %v1695
        %1860 = vmatprep.subr.mxu0 %v1693
        %1861 = vmatpush1.msra.mxu0 %v1691
        %1862 = vmatprep.subr.mxu0 %v1689
        %1863 = vmatpush1.msra.mxu0 %v1687
        %1864 = vmatprep.subr.mxu0 %v1685
        %1865 = vmatpush1.msra.mxu0 %v1683
        %1866 = vmatprep.subr.mxu0 %v1681
        %1867 = vmatpush1.msra.mxu0 %v1679
        %1868 = vmatprep.subr.mxu0 %v1677
        %1869 = vmatpush1.msra.mxu0 %v1675
        %1870 = vmatprep.subr.mxu0 %v1673
        %1871 = vmatpush1.msra.mxu0 %v1671
        %1872 = vmatprep.subr.mxu0 %v1669
        %1873 = vmatpush1.msra.mxu0 %v1667
        %1874 = vmatprep.subr.mxu0 %v1665
        %1875 = vmatpush1.msra.mxu0 %v1663
        %1876 = vmatprep.subr.mxu0 %v1661
        %1877 = vmatpush1.msra.mxu0 %v1659
        %1878 = vmatprep.subr.mxu0 %v1657
        %1879 = vmatpush1.msra.mxu0 %v1655
        %1880 = vmatprep.subr.mxu0 %v1653
        %1881 = vmatpush1.msra.mxu0 %v1651
        %1882 = vmatprep.subr.mxu0 %v1649
        %1883 = vmatpush1.msra.mxu0 %v1647
        %1884 = vmatprep.subr.mxu0 %v1773
        %1885 = vmatpush2.msra.mxu0 %v1771
        %1886 = vmatprep.subr.mxu0 %v1769
        %1887 = vmatpush2.msra.mxu0 %v1767
        %1888 = vmatprep.subr.mxu0 %v1765
        %1889 = vmatpush2.msra.mxu0 %v1763
        %1890 = vmatprep.subr.mxu0 %v1761
        %1891 = vmatpush2.msra.mxu0 %v1759
        %1892 = vmatprep.subr.mxu0 %v1757
        %1893 = vmatpush2.msra.mxu0 %v1755
        %1894 = vmatprep.subr.mxu0 %v1753
        %1895 = vmatpush2.msra.mxu0 %v1751
        %1896 = vmatprep.subr.mxu0 %v1749
        %1897 = vmatpush2.msra.mxu0 %v1747
        %1898 = vmatprep.subr.mxu0 %v1745
        %1899 = vmatpush2.msra.mxu0 %v1743
        %1900 = vmatprep.subr.mxu0 %v1741
        %1901 = vmatpush2.msra.mxu0 %v1739
        %1902 = vmatprep.subr.mxu0 %v1737
        %1903 = vmatpush2.msra.mxu0 %v1735
        %1904 = vmatprep.subr.mxu0 %v1733
        %1905 = vmatpush2.msra.mxu0 %v1731
        %1906 = vmatprep.subr.mxu0 %v1729
        %1907 = vmatpush2.msra.mxu0 %v1727
        %1908 = vmatprep.subr.mxu0 %v1725
        %1909 = vmatpush2.msra.mxu0 %v1723
        %1910 = vmatprep.subr.mxu0 %v1721
        %1911 = vmatpush2.msra.mxu0 %v1719
        %1912 = vmatprep.subr.mxu0 %v1717
        %1913 = vmatpush2.msra.mxu0 %v1715
        %1914 = vmatprep.subr.mxu0 %v1713
        %1915 = vmatpush2.msra.mxu0 %v1711
        %1916 = vmatprep.mubr.f32.mxu0 %v1849
        %1917 = vmatmul.mubr.f32.gmra.mxu0 %v1848
        %v1918 = vpop.f32.mrf.mxu0
        %v1919 = vadd.f32 0.0, %v1918
        %v1920 = vpop.f32.mrf.mxu0
        %v1921 = vadd.f32 0.0, %v1920
        %1922 = vdwg.mxu0
        %v1923 = vrcp.pop %v1810
        %v1924 = vrcp.pop %v1847
        %v1925 = vmul.f32 %v1919, %v1923
        %v1926 = vmul.f32 %v1921, %v1924
        %v1927 = vld [vmem:[%s3] sm:$0xf]
        %v1928 = vld [vmem:[%s4] sm:$0xf]
        %1930 = vset.pattern.permute.xlu0 0
        %1931 = vperm.xlu0 %1930, %v1928
        %v1932 = vpop.permute.xlu0 %1931
        %v1935 = vsel %vm1149, %v1927, 0
        %v1938 = vsel %vm1246, %v1925, 0
        %v1941 = vsel %vm1246, %v1926, 0
        %1943 = vmatprep.subr.mxu0 0.0
        %1944 = vmatpush1.msra.mxu0 0.0
        %1945 = vmatprep.subr.mxu0 0.0
        %1946 = vmatpush1.msra.mxu0 0.0
        %1947 = vmatprep.subr.mxu0 0.0
        %1948 = vmatpush1.msra.mxu0 0.0
        %1949 = vmatprep.subr.mxu0 0.0
        %1950 = vmatpush1.msra.mxu0 0.0
        %1951 = vmatprep.subr.mxu0 0.0
        %1952 = vmatpush1.msra.mxu0 0.0
        %1953 = vmatprep.subr.mxu0 0.0
        %1954 = vmatpush1.msra.mxu0 0.0
        %1955 = vmatprep.subr.mxu0 0.0
        %1956 = vmatpush1.msra.mxu0 0.0
        %1957 = vmatprep.subr.mxu0 0.0
        %1958 = vmatpush1.msra.mxu0 0.0
        %1959 = vmatprep.subr.mxu0 0.0
        %1960 = vmatpush1.msra.mxu0 0.0
        %1961 = vmatprep.subr.mxu0 0.0
        %1962 = vmatpush1.msra.mxu0 0.0
        %1963 = vmatprep.subr.mxu0 0.0
        %1964 = vmatpush1.msra.mxu0 0.0
        %1965 = vmatprep.subr.mxu0 0.0
        %1966 = vmatpush1.msra.mxu0 0.0
        %1967 = vmatprep.subr.mxu0 0.0
        %1968 = vmatpush1.msra.mxu0 0.0
        %1969 = vmatprep.subr.mxu0 0.0
        %1970 = vmatpush1.msra.mxu0 0.0
        %1971 = vmatprep.subr.mxu0 0.0
        %1972 = vmatpush1.msra.mxu0 0.0
        %1973 = vmatprep.subr.mxu0 %v1941
        %1974 = vmatpush1.msra.mxu0 %v1938
        %1975 = vmatprep.subr.mxu0 0.0
        %1976 = vmatpush2.msra.mxu0 0.0
        %1977 = vmatprep.subr.mxu0 0.0
        %1978 = vmatpush2.msra.mxu0 0.0
        %1979 = vmatprep.subr.mxu0 0.0
        %1980 = vmatpush2.msra.mxu0 0.0
        %1981 = vmatprep.subr.mxu0 0.0
        %1982 = vmatpush2.msra.mxu0 0.0
        %1983 = vmatprep.subr.mxu0 0.0
        %1984 = vmatpush2.msra.mxu0 0.0
        %1985 = vmatprep.subr.mxu0 0.0
        %1986 = vmatpush2.msra.mxu0 0.0
        %1987 = vmatprep.subr.mxu0 0.0
        %1988 = vmatpush2.msra.mxu0 0.0
        %1989 = vmatprep.subr.mxu0 0.0
        %1990 = vmatpush2.msra.mxu0 0.0
        %1991 = vmatprep.subr.mxu0 0.0
        %1992 = vmatpush2.msra.mxu0 0.0
        %1993 = vmatprep.subr.mxu0 0.0
        %1994 = vmatpush2.msra.mxu0 0.0
        %1995 = vmatprep.subr.mxu0 0.0
        %1996 = vmatpush2.msra.mxu0 0.0
        %1997 = vmatprep.subr.mxu0 0.0
        %1998 = vmatpush2.msra.mxu0 0.0
        %1999 = vmatprep.subr.mxu0 0.0
        %2000 = vmatpush2.msra.mxu0 0.0
        %2001 = vmatprep.subr.mxu0 0.0
        %2002 = vmatpush2.msra.mxu0 0.0
        %2003 = vmatprep.subr.mxu0 0.0
        %2004 = vmatpush2.msra.mxu0 0.0
        %2005 = vmatprep.subr.mxu0 0.0
        %2006 = vmatpush2.msra.mxu0 0.0
        %2007 = vmatprep.mubr.f32.mxu0 0.0
        %2008 = vmatmul.mubr.f32.gmra.mxu0 %v1935
        %v2009 = vpop.f32.mrf.mxu0
        %v2010 = vadd.f32 %v1932, %v2009
        %v2011 = vpop.f32.mrf.mxu0
        %v2012 = vadd.f32 %v1932, %v2011
        %2013 = vdwg.mxu0
        %v2016 = vcombine.low %v2010, %v2012
        %v2018 = vadd.f32 %v223, %v2016
        %2019 = vst [vmem:[%s217] sm:$0xff] %v2018
        %s2020 = sand.u32 %s137, 1
        %s2021 = scalar_lea.sflag [#allocation3], %s2020
        %s2022 = sand.u32 %s137, 1
        %s2023 = smul.addr %s2022, 8
        %s2024 = scalar_lea.vmem [#allocation2], %s2023
        // Predicated region
        $region41: #{tpu_custom_call.1} parent=39 // pred_check
          %p2025 = pneg %p147
        $region42: #{tpu_custom_call.1} parent=39 // pred_check_branch
          %2027 = sbr.rel (%p2025) target = $region44
        $region43: #{tpu_custom_call.1} parent=39 // pred_region
          %s2029 = ssub.s32 128, 128
          %2030 = vsyncadd %s2021, %s2029
          %s2031 = smul.addr %s19, 2
          %s2032 = smul.addr %s2031, 64
          %s2033 = scalar_lea.hbm %s5, %s2032
          %s2035 = sshll.u32 %s2024, 4
          %s2036 = int_to_ptr.vmem [resolvable:$true] %s2035
          %2038 = dma.vmem_to_hbm [thread:$0]  %s2036, 128, %s2033, %s2021
        $region44: #{tpu_custom_call.1} parent=39 // pred_fallthru
          _
      $region40: #{tpu_custom_call.1} parent=5 // pred_fallthru
        _
      %p2039 = scmp.le.s32.totalorder 2, %s14
      // Predicated region
      $region45: #{tpu_custom_call.1} parent=5 // pred_check
        %p2040 = pneg %p2039
      $region46: #{tpu_custom_call.1} parent=5 // pred_check_branch
        %2042 = sbr.rel (%p2040) target = $region48
      $region47: #{tpu_custom_call.1} parent=5 // pred_region
        %s2043 = ssub.s32 %s14, 2
        // Predicated region
        $region49: #{tpu_custom_call.1} parent=47 // pred_check
          %p2044 = pneg %p153
        $region50: #{tpu_custom_call.1} parent=47 // pred_check_branch
          %2046 = sbr.rel (%p2044) target = $region52
        $region51: #{tpu_custom_call.1} parent=47 // pred_region
          %s2047 = sand.u32 %s138, 1
          %s2048 = scalar_lea.sflag [#allocation3], %s2047
          %s2049 = sand.u32 %s138, 1
          %s2050 = smul.addr %s2049, 8
          %s2051 = scalar_lea.vmem [#allocation2], %s2050
          %2052 = dma.done %s2048, 128
        $region52: #{tpu_custom_call.1} parent=47 // pred_fallthru
          _
      $region48: #{tpu_custom_call.1} parent=5 // pred_fallthru
        _
    $region6: #{tpu_custom_call.1} parent=1 // loop_footer
      %s18 = sadd.s32 1, %s14
    $region7: #{tpu_custom_call.1} parent=1 // loop_footer_branch
      %13 = sbr.rel target = $region3
    $region8: #{tpu_custom_call.1} parent=1 // loop_exit
      _
    %2053 = vsyncpa [#allocation3], 1
    %s2054 = scalar_lea.sflag [#allocation3], 1
    %2055 = vsyncpa %s2054, 1

</llo_original>
